<compile_context>
chip_gen: v7x
topology: tpu7x:2x2x1
jax: 0.10.0
libtpu: 0.0.40
codegen_flags: <defaults>
</compile_context>

<pallas_src>
import functools

import jax
import jax.numpy as jnp
from jax import lax
from jax.experimental import pallas as pl
from jax.experimental.pallas import tpu as pltpu

# Matmul-operand dtype. Set to jnp.bfloat16 on v6e/v7x to use the MXU-native
# path and halve vreg/VMEM footprint (keep f32 elementwise math on v5e).
MATMUL_DTYPE = jnp.float32


# ----------------------------------------------------------------------------
# In-kernel math helpers (VPU/EUP only; no erf primitive needed).
# ----------------------------------------------------------------------------
def _erf(x):
    # Abramowitz & Stegun 7.1.26, max abs error ~1.5e-7.
    a1, a2, a3, a4, a5 = (0.254829592, -0.284496736, 1.421413741,
                          -1.453152027, 1.061405429)
    p = 0.3275911
    ax = jnp.abs(x)
    t = 1.0 / (1.0 + p * ax)
    poly = ((((a5 * t + a4) * t + a3) * t + a2) * t + a1) * t
    y = 1.0 - poly * jnp.exp(-ax * ax)
    return jnp.where(x >= 0.0, y, -y)


def _gelu_exact(x):
    # torch's default F.gelu (erf form).
    return 0.5 * x * (1.0 + _erf(x * 0.7071067811865476))


# ----------------------------------------------------------------------------
# Fused kernel: one batch tile of the whole TCN stack + dense head.
# ----------------------------------------------------------------------------
def fused_tcn_kernel(x_ref, slab_ref, o_ref, *, blocks, offsets, K, S):
    """x_ref: (C_in, TB*S) channel-major; slab_ref: (R, 128) packed weights;
    o_ref: (TB, output_size).

    `blocks`  = static tuple of (dilation, cin, cout, has_down).
    `offsets` = static tuple of (row_off, rows, cols) slab slices, consumed in
                the exact order prepare_fused_params() wrote them.
    """
    _, T = x_ref.shape
    TB = T // S

    reader = iter(offsets)

    def take():
        off, r, c = next(reader)
        return slab_ref[off:off + r, 0:c]          # static slice of the slab

    # Hoisted per-tile constants: one within-sequence time iota, masks cached
    # per unique shift (no per-block zeros/broadcast re-emission).
    t_in_seq = lax.broadcasted_iota(jnp.int32, (1, T), 1) % S
    mask_cache = {}

    def keep_mask(shift):
        if shift not in mask_cache:
            mask_cache[shift] = t_in_seq >= shift
        return mask_cache[shift]

    def causal_conv(v, taps_w, b, dilation):
        # y[:, t] = b + sum_k W_k @ v[:, t - (K-1-k)*d]   (zero before seq start)
        # Shifted taps: XLU lane-rotate + mask (no concatenates, no pad buffer).
        acc = None
        for k in range(K):
            shift = (K - 1 - k) * dilation
            if shift == 0:
                xk = v
            else:
                xk = pltpu.roll(v, shift, axis=1)           # xk[:,t] = v[:,t-shift]
                xk = jnp.where(keep_mask(shift), xk, 0.0)   # zero the causal pad
            yk = jnp.dot(taps_w[k].astype(MATMUL_DTYPE),
                         xk.astype(MATMUL_DTYPE),
                         preferred_element_type=jnp.float32)
            acc = yk if acc is None else acc + yk
        return acc + b

    h = x_ref[...].astype(jnp.float32)                      # (C_in, T)

    for (dilation, cin, cout, has_down) in blocks:
        w1_taps = [take() for _ in range(K)]
        b1 = take()
        w2_taps = [take() for _ in range(K)]
        b2 = take()
        if has_down:
            wd = take()
            bd = take()
        x_in = h
        h = jnp.maximum(causal_conv(h, w1_taps, b1, dilation), 0.0)  # relu1 (+dropout=id)
        h = jnp.maximum(causal_conv(h, w2_taps, b2, dilation), 0.0)  # relu2 (+dropout=id)
        if has_down:                                         # 1x1 conv downsample
            res = jnp.dot(wd.astype(MATMUL_DTYPE), x_in.astype(MATMUL_DTYPE),
                          preferred_element_type=jnp.float32) + bd
        else:                                                # identity residual
            res = x_in
        h = jnp.maximum(h + res, 0.0)                        # final block relu

    # dropout = identity (eval). Extract the last time step of every sequence
    # in the tile with a selection matmul (MXU does the lane gather).
    t_idx = lax.broadcasted_iota(jnp.int32, (T, TB), 0)
    j_idx = lax.broadcasted_iota(jnp.int32, (T, TB), 1)
    sel = jnp.where(t_idx == j_idx * S + (S - 1), 1.0, 0.0)
    h_last = jnp.dot(h, sel, preferred_element_type=jnp.float32)     # (C_last, TB)

    # Head: GELU(fcin) -> folded affine (fc0..fc{L-2} + fcout).
    w_in = take(); b_in = take()
    w_fold = take(); b_fold = take()
    z = jnp.dot(w_in.astype(MATMUL_DTYPE), h_last.astype(MATMUL_DTYPE),
                preferred_element_type=jnp.float32) + b_in
    z = _gelu_exact(z)
    y = jnp.dot(w_fold.astype(MATMUL_DTYPE), z.astype(MATMUL_DTYPE),
                preferred_element_type=jnp.float32) + b_fold         # (out, TB)
    o_ref[...] = y.T.astype(o_ref.dtype)                             # (TB, out)


def fused_forward(h_bsc, slab, offsets, blocks, K, output_size):
    """h_bsc: (B, S, F) channel-last activations after the view/slice."""
    B, S, F = h_bsc.shape
    # Batch tile: make per-tile lane width (TB*S) a multiple of 128 when
    # possible (lane-dense matmuls & stores); otherwise run a single tile
    # covering the full array (block == full dims is always legal).
    if 128 % S == 0 and B * S > 128:
        TB = 128 // S
    else:
        TB = B
    Bpad = -(-B // TB) * TB
    if Bpad != B:
        h_bsc = jnp.concatenate(
            [h_bsc, jnp.zeros((Bpad - B, S, F), h_bsc.dtype)], axis=0)
    # Channel-major layout: channels on sublanes, (batch*time) on lanes.
    x_cm = jnp.transpose(h_bsc, (2, 0, 1)).reshape(F, Bpad * S)
    num_tiles = Bpad // TB

    kernel = functools.partial(fused_tcn_kernel, blocks=blocks,
                               offsets=offsets, K=K, S=S)
    out = pl.pallas_call(
        kernel,
        out_shape=jax.ShapeDtypeStruct((Bpad, output_size), jnp.float32),
        grid=(num_tiles,),
        in_specs=[
            pl.BlockSpec((F, TB * S), lambda b: (0, b)),   # batch tile (pipelined)
            pl.BlockSpec(slab.shape, lambda b: (0, 0)),    # weight slab: 1 DMA, resident
        ],
        out_specs=pl.BlockSpec((TB, output_size), lambda b: (b, 0)),
        compiler_params=pltpu.CompilerParams(
            dimension_semantics=("parallel",),             # megacore / v7x 2-TC split
            vmem_limit_bytes=32 * 1024 * 1024),
    )(x_cm, slab)
    return out[:B]


# ----------------------------------------------------------------------------
# Parameter construction (deterministic, synthetic, torch-shaped).
# weight_norm(g * v/||v||) is folded into a single effective weight per conv.
# ----------------------------------------------------------------------------
def init_params(key, input_feat, num_channels, kernel_size, neurons_per_layer,
                output_size):
    keys = iter(jax.random.split(key, 128))

    def rand(shape, scale=0.1):
        return (scale * jax.random.normal(next(keys), shape)).astype(jnp.float32)

    tcn_blocks = []
    cin = input_feat
    for level, cout in enumerate(num_channels):
        blk = {"w1": rand((cout, cin, kernel_size)),    # torch conv1d layout
               "b1": rand((cout,)),
               "w2": rand((cout, cout, kernel_size)),
               "b2": rand((cout,)),
               "dilation": 2 ** level}
        if cin != cout:                # torch block only has downsample then
            blk["wd"] = rand((cout, cin))
            blk["bd"] = rand((cout,))
        tcn_blocks.append(blk)
        cin = cout

    dims = [num_channels[-1]] + list(neurons_per_layer) + [output_size]
    head = [(rand((dims[i + 1], dims[i])), rand((dims[i + 1],)))
            for i in range(len(dims) - 1)]                 # (W (out,in), b (out,))
    return {"tcn": tcn_blocks, "head": head}


def prepare_fused_params(params):
    """Pack every parameter into one lane-padded f32 slab + static metadata."""
    mats = []
    blocks = []
    K = params["tcn"][0]["w1"].shape[2]
    for blk in params["tcn"]:
        cout, cin, K_ = blk["w1"].shape
        for k in range(K_):
            mats.append(blk["w1"][:, :, k])                 # (Cout, Cin)
        mats.append(blk["b1"].reshape(cout, 1))
        for k in range(K_):
            mats.append(blk["w2"][:, :, k])                 # (Cout, Cout)
        mats.append(blk["b2"].reshape(cout, 1))
        has_down = "wd" in blk
        if has_down:
            mats.append(blk["wd"])                          # (Cout, Cin)
            mats.append(blk["bd"].reshape(cout, 1))
        blocks.append((int(blk["dilation"]), cin, cout, has_down))

    # Head: fcin stays; fc0..fc{L-2}+fcout (no activations) fold to one affine.
    head = params["head"]
    w_in, b_in = head[0]
    w_fold, b_fold = head[1][0], head[1][1].reshape(-1, 1)
    for (W, b) in head[2:]:
        w_fold = W @ w_fold
        b_fold = W @ b_fold + b.reshape(-1, 1)
    mats += [w_in, b_in.reshape(-1, 1), w_fold, b_fold]

    max_c = max(int(m.shape[1]) for m in mats)
    lane_pad = max(128, -(-max_c // 128) * 128)
    offsets = []
    row = 0
    for m in mats:
        r, c = int(m.shape[0]), int(m.shape[1])
        offsets.append((row, r, c))
        row += -(-r // 8) * 8                               # 8-sublane aligned rows
    slab = jnp.zeros((row, lane_pad), jnp.float32)
    for m, (off, r, c) in zip(mats, offsets):
        slab = slab.at[off:off + r, 0:c].set(m.astype(jnp.float32))
    return slab, tuple(offsets), tuple(blocks), K


# ----------------------------------------------------------------------------
# Full forward (view/slice/transpose glue in plain JAX, the rest in one kernel).
# ----------------------------------------------------------------------------
def model_forward(x, slab, offsets, blocks, K, *, input_feat, num_BS_per_pos,
                  output_size):
    B = x.shape[0]
    # x.view(B, -1, input_size[1]) then [:, :num_BS_per_pos, :]
    h = x.reshape(B, -1, input_feat)[:, :num_BS_per_pos, :].astype(jnp.float32)
    # Only the last time step feeds the head -> keep just the trailing
    # receptive field (rounded up to a multiple of 8 for dense lanes).
    S = h.shape[1]
    rf = 1 + 2 * (K - 1) * (2 ** len(blocks) - 1)
    s_keep = min(S, -(-rf // 8) * 8)
    if s_keep < S:
        h = h[:, S - s_keep:, :]
    # torch does tcn(x.transpose(1,2)).transpose(1,2); the kernel is natively
    # channel-major, so those transposes are just wrapper layout plumbing.
    y = fused_forward(h, slab, offsets, blocks, K, output_size)
    # TODO(synk): loss_function / evaluate / BNN_algorithm plumbing and the
    # dropout train path are not part of the forward hot path; not implemented.
    return {"y": y}


# ----------------------------------------------------------------------------
# Pure-JAX reference (unfused, unfolded, channel-last) for correctness check.
# ----------------------------------------------------------------------------
def reference_forward(x, params, *, input_feat, num_BS_per_pos):
    B = x.shape[0]
    h = x.reshape(B, -1, input_feat)[:, :num_BS_per_pos, :].astype(jnp.float32)
    for blk in params["tcn"]:
        d = int(blk["dilation"])

        def conv(v, w, b):
            Bb, S, Cin = v.shape
            Cout, _, Kk = w.shape
            acc = jnp.zeros((Bb, S, Cout), jnp.float32) + b
            for k in range(Kk):
                shift = (Kk - 1 - k) * d
                if shift == 0:
                    vs = v
                else:
                    vs = jnp.concatenate(
                        [jnp.zeros((Bb, shift, Cin), jnp.float32),
                         v[:, :S - shift, :]], axis=1)
                acc = acc + jnp.einsum("bsc,oc->bso", vs, w[:, :, k])
            return acc

        x_in = h
        h = jnp.maximum(conv(h, blk["w1"], blk["b1"]), 0.0)
        h = jnp.maximum(conv(h, blk["w2"], blk["b2"]), 0.0)
        res = (jnp.einsum("bsc,oc->bso", x_in, blk["wd"]) + blk["bd"]
               if "wd" in blk else x_in)
        h = jnp.maximum(h + res, 0.0)
    z = h[:, -1, :]
    hp = params["head"]
    z = jax.nn.gelu(z @ hp[0][0].T + hp[0][1], approximate=False)
    for (W, b) in hp[1:]:
        z = z @ W.T + b
    return z


if __name__ == "__main__":
    key = jax.random.PRNGKey(0)
    k_x, k_p = jax.random.split(key)

    # Small synthetic config consistent with the module's __init__:
    B = 32                      # batch (2 tiles of 16 -> exercises the grid)
    S_total = 10                # input_size[0]
    F_in = 4                    # input_size[1]  (TCN input channels)
    num_channels = [8, 8]       # TCN levels (dilations 1, 2)
    kernel_size = 2
    neurons_per_layer = [32, 16]
    output_size = 3             # xyz position
    num_BS_per_pos = 8          # output_additional_data['num_BS_per_pos']

    x = jax.random.normal(k_x, (B, S_total * F_in), dtype=jnp.float32)
    params = init_params(k_p, F_in, num_channels, kernel_size,
                         neurons_per_layer, output_size)
    slab, offsets, blocks, K = prepare_fused_params(params)

    out = model_forward(x, slab, offsets, blocks, K, input_feat=F_in,
                        num_BS_per_pos=num_BS_per_pos, output_size=output_size)
    y = jax.block_until_ready(out["y"])
    assert y.shape == (B, output_size) and y.dtype == jnp.float32

    # Validate against the pure-JAX reference (folded head + erf polynomial
    # => tolerance check rather than bit equality).
    y_ref = jax.block_until_ready(
        reference_forward(x, params, input_feat=F_in,
                          num_BS_per_pos=num_BS_per_pos))
    assert jnp.allclose(y, y_ref, rtol=2e-3, atol=2e-4), (y, y_ref)

    print("KERNEL_OK")
</pallas_src>

<mosaic_0001>
module attributes {stable_mosaic.version = 11 : i64} {
  func.func @fused_tcn_kernel(%arg0: i32, %arg1: memref<4x128xf32, #tpu.memory_space<vmem>>, %arg2: memref<192x128xf32, #tpu.memory_space<vmem>>, %arg3: memref<16x3xf32, #tpu.memory_space<vmem>>) attributes {dimension_semantics = [#tpu.dimension_semantics<parallel>], iteration_bounds = array<i64: 2>, scalar_prefetch = 0 : i64, scratch_operands = 0 : i64, tpu.core_type = #tpu.core_type<tc>, window_params = [{transform_indices = @transform_0, window_bounds = array<i64: 4, 128>}, {pipeline_mode = #tpu.pipeline_mode<synchronous>, transform_indices = @transform_1, window_bounds = array<i64: 192, 128>}, {transform_indices = @transform_2, window_bounds = array<i64: 16, 3>}]} {
    %0 = tpu.iota {dimensions = array<i32: 1>} : vector<1x128xi32>
    %c8_i32 = arith.constant 8 : i32
    %c0_i32 = arith.constant 0 : i32
    %1 = arith.cmpi eq, %c8_i32, %c0_i32 : i32
    %c1_i32 = arith.constant 1 : i32
    %2 = arith.select %1, %c1_i32, %c8_i32 : i32
    %3 = vector.broadcast %2 : i32 to vector<1x128xi32>
    %4 = arith.remsi %0, %3 : vector<1x128xi32>
    %c0_i32_0 = arith.constant 0 : i32
    %5 = vector.broadcast %c0_i32_0 : i32 to vector<1x128xi32>
    %6 = arith.cmpi ne, %4, %5 : vector<1x128xi32>
    %c0_i32_1 = arith.constant 0 : i32
    %7 = vector.broadcast %c0_i32_1 : i32 to vector<1x128xi32>
    %8 = arith.cmpi slt, %4, %7 : vector<1x128xi32>
    %c0_i32_2 = arith.constant 0 : i32
    %9 = arith.cmpi slt, %2, %c0_i32_2 : i32
    %10 = vector.broadcast %9 : i1 to vector<1x128xi1>
    %11 = vector.broadcast %10 : vector<1x128xi1> to vector<1x128xi1>
    %12 = arith.xori %8, %11 : vector<1x128xi1>
    %13 = arith.andi %12, %6 : vector<1x128xi1>
    %14 = vector.broadcast %2 : i32 to vector<1x128xi32>
    %15 = arith.addi %4, %14 : vector<1x128xi32>
    %16 = arith.select %13, %15, %4 : vector<1x128xi1>, vector<1x128xi32>
    %c0 = arith.constant 0 : index
    %c0_3 = arith.constant 0 : index
    %17 = vector.load %arg1[%c0, %c0_3] : memref<4x128xf32, #tpu.memory_space<vmem>>, vector<4x128xf32>
    %c0_4 = arith.constant 0 : index
    %c0_5 = arith.constant 0 : index
    %18 = vector.load %arg2[%c0_4, %c0_5] : memref<192x128xf32, #tpu.memory_space<vmem>>, vector<8x4xf32>
    %c8 = arith.constant 8 : index
    %c0_6 = arith.constant 0 : index
    %19 = vector.load %arg2[%c8, %c0_6] : memref<192x128xf32, #tpu.memory_space<vmem>>, vector<8x4xf32>
    %c16 = arith.constant 16 : index
    %c0_7 = arith.constant 0 : index
    %20 = vector.load %arg2[%c16, %c0_7] : memref<192x128xf32, #tpu.memory_space<vmem>>, vector<8x1xf32>
    %c24 = arith.constant 24 : index
    %c0_8 = arith.constant 0 : index
    %21 = vector.load %arg2[%c24, %c0_8] : memref<192x128xf32, #tpu.memory_space<vmem>>, vector<8x8xf32>
    %c32 = arith.constant 32 : index
    %c0_9 = arith.constant 0 : index
    %22 = vector.load %arg2[%c32, %c0_9] : memref<192x128xf32, #tpu.memory_space<vmem>>, vector<8x8xf32>
    %c40 = arith.constant 40 : index
    %c0_10 = arith.constant 0 : index
    %23 = vector.load %arg2[%c40, %c0_10] : memref<192x128xf32, #tpu.memory_space<vmem>>, vector<8x1xf32>
    %c48 = arith.constant 48 : index
    %c0_11 = arith.constant 0 : index
    %24 = vector.load %arg2[%c48, %c0_11] : memref<192x128xf32, #tpu.memory_space<vmem>>, vector<8x4xf32>
    %c56 = arith.constant 56 : index
    %c0_12 = arith.constant 0 : index
    %25 = vector.load %arg2[%c56, %c0_12] : memref<192x128xf32, #tpu.memory_space<vmem>>, vector<8x1xf32>
    %c1_i32_13 = arith.constant 1 : i32
    %26 = tpu.dynamic_rotate %17 by %c1_i32_13 dim 1 : vector<4x128xf32>, i32 -> vector<4x128xf32>
    %c1_i32_14 = arith.constant 1 : i32
    %27 = vector.broadcast %c1_i32_14 : i32 to vector<1x128xi32>
    %28 = arith.cmpi sge, %16, %27 : vector<1x128xi32>
    %cst = arith.constant 0.000000e+00 : f32
    %29 = vector.shape_cast %28 : vector<1x128xi1> to vector<1x128xi1>
    %30 = vector.broadcast %29 : vector<1x128xi1> to vector<4x128xi1>
    %31 = vector.broadcast %cst : f32 to vector<4x128xf32>
    %32 = arith.select %30, %26, %31 : vector<4x128xi1>, vector<4x128xf32>
    %cst_15 = arith.constant dense<0.000000e+00> : vector<8x128xf32>
    %33 = tpu.matmul %18, %32, %cst_15 {dimension_numbers = #tpu.dot_dimension_numbers<[1], [0], [0], [1], [0, 0, 1, 1], [], []>} : vector<8x4xf32>, vector<4x128xf32>, vector<8x128xf32> -> vector<8x128xf32>
    %cst_16 = arith.constant dense<0.000000e+00> : vector<8x128xf32>
    %34 = tpu.matmul %19, %17, %cst_16 {dimension_numbers = #tpu.dot_dimension_numbers<[1], [0], [0], [1], [0, 0, 1, 1], [], []>} : vector<8x4xf32>, vector<4x128xf32>, vector<8x128xf32> -> vector<8x128xf32>
    %35 = arith.addf %33, %34 : vector<8x128xf32>
    %36 = vector.broadcast %20 : vector<8x1xf32> to vector<8x128xf32>
    %37 = arith.addf %35, %36 : vector<8x128xf32>
    %cst_17 = arith.constant 0.000000e+00 : f32
    %38 = vector.broadcast %cst_17 : f32 to vector<8x128xf32>
    %39 = arith.maximumf %37, %38 : vector<8x128xf32>
    %c1_i32_18 = arith.constant 1 : i32
    %40 = tpu.dynamic_rotate %39 by %c1_i32_18 dim 1 : vector<8x128xf32>, i32 -> vector<8x128xf32>
    %cst_19 = arith.constant 0.000000e+00 : f32
    %41 = vector.shape_cast %28 : vector<1x128xi1> to vector<1x128xi1>
    %42 = vector.broadcast %41 : vector<1x128xi1> to vector<8x128xi1>
    %43 = vector.broadcast %cst_19 : f32 to vector<8x128xf32>
    %44 = arith.select %42, %40, %43 : vector<8x128xi1>, vector<8x128xf32>
    %cst_20 = arith.constant dense<0.000000e+00> : vector<8x128xf32>
    %45 = tpu.matmul %21, %44, %cst_20 {dimension_numbers = #tpu.dot_dimension_numbers<[1], [0], [0], [1], [0, 0, 1, 1], [], []>} : vector<8x8xf32>, vector<8x128xf32>, vector<8x128xf32> -> vector<8x128xf32>
    %cst_21 = arith.constant dense<0.000000e+00> : vector<8x128xf32>
    %46 = tpu.matmul %22, %39, %cst_21 {dimension_numbers = #tpu.dot_dimension_numbers<[1], [0], [0], [1], [0, 0, 1, 1], [], []>} : vector<8x8xf32>, vector<8x128xf32>, vector<8x128xf32> -> vector<8x128xf32>
    %47 = arith.addf %45, %46 : vector<8x128xf32>
    %48 = vector.broadcast %23 : vector<8x1xf32> to vector<8x128xf32>
    %49 = arith.addf %47, %48 : vector<8x128xf32>
    %cst_22 = arith.constant 0.000000e+00 : f32
    %50 = vector.broadcast %cst_22 : f32 to vector<8x128xf32>
    %51 = arith.maximumf %49, %50 : vector<8x128xf32>
    %cst_23 = arith.constant dense<0.000000e+00> : vector<8x128xf32>
    %52 = tpu.matmul %24, %17, %cst_23 {dimension_numbers = #tpu.dot_dimension_numbers<[1], [0], [0], [1], [0, 0, 1, 1], [], []>} : vector<8x4xf32>, vector<4x128xf32>, vector<8x128xf32> -> vector<8x128xf32>
    %53 = vector.broadcast %25 : vector<8x1xf32> to vector<8x128xf32>
    %54 = arith.addf %52, %53 : vector<8x128xf32>
    %55 = arith.addf %51, %54 : vector<8x128xf32>
    %cst_24 = arith.constant 0.000000e+00 : f32
    %56 = vector.broadcast %cst_24 : f32 to vector<8x128xf32>
    %57 = arith.maximumf %55, %56 : vector<8x128xf32>
    %c64 = arith.constant 64 : index
    %c0_25 = arith.constant 0 : index
    %58 = vector.load %arg2[%c64, %c0_25] : memref<192x128xf32, #tpu.memory_space<vmem>>, vector<8x8xf32>
    %c72 = arith.constant 72 : index
    %c0_26 = arith.constant 0 : index
    %59 = vector.load %arg2[%c72, %c0_26] : memref<192x128xf32, #tpu.memory_space<vmem>>, vector<8x8xf32>
    %c80 = arith.constant 80 : index
    %c0_27 = arith.constant 0 : index
    %60 = vector.load %arg2[%c80, %c0_27] : memref<192x128xf32, #tpu.memory_space<vmem>>, vector<8x1xf32>
    %c88 = arith.constant 88 : index
    %c0_28 = arith.constant 0 : index
    %61 = vector.load %arg2[%c88, %c0_28] : memref<192x128xf32, #tpu.memory_space<vmem>>, vector<8x8xf32>
    %c96 = arith.constant 96 : index
    %c0_29 = arith.constant 0 : index
    %62 = vector.load %arg2[%c96, %c0_29] : memref<192x128xf32, #tpu.memory_space<vmem>>, vector<8x8xf32>
    %c104 = arith.constant 104 : index
    %c0_30 = arith.constant 0 : index
    %63 = vector.load %arg2[%c104, %c0_30] : memref<192x128xf32, #tpu.memory_space<vmem>>, vector<8x1xf32>
    %c2_i32 = arith.constant 2 : i32
    %64 = tpu.dynamic_rotate %57 by %c2_i32 dim 1 : vector<8x128xf32>, i32 -> vector<8x128xf32>
    %c2_i32_31 = arith.constant 2 : i32
    %65 = vector.broadcast %c2_i32_31 : i32 to vector<1x128xi32>
    %66 = arith.cmpi sge, %16, %65 : vector<1x128xi32>
    %cst_32 = arith.constant 0.000000e+00 : f32
    %67 = vector.shape_cast %66 : vector<1x128xi1> to vector<1x128xi1>
    %68 = vector.broadcast %67 : vector<1x128xi1> to vector<8x128xi1>
    %69 = vector.broadcast %cst_32 : f32 to vector<8x128xf32>
    %70 = arith.select %68, %64, %69 : vector<8x128xi1>, vector<8x128xf32>
    %cst_33 = arith.constant dense<0.000000e+00> : vector<8x128xf32>
    %71 = tpu.matmul %58, %70, %cst_33 {dimension_numbers = #tpu.dot_dimension_numbers<[1], [0], [0], [1], [0, 0, 1, 1], [], []>} : vector<8x8xf32>, vector<8x128xf32>, vector<8x128xf32> -> vector<8x128xf32>
    %cst_34 = arith.constant dense<0.000000e+00> : vector<8x128xf32>
    %72 = tpu.matmul %59, %57, %cst_34 {dimension_numbers = #tpu.dot_dimension_numbers<[1], [0], [0], [1], [0, 0, 1, 1], [], []>} : vector<8x8xf32>, vector<8x128xf32>, vector<8x128xf32> -> vector<8x128xf32>
    %73 = arith.addf %71, %72 : vector<8x128xf32>
    %74 = vector.broadcast %60 : vector<8x1xf32> to vector<8x128xf32>
    %75 = arith.addf %73, %74 : vector<8x128xf32>
    %cst_35 = arith.constant 0.000000e+00 : f32
    %76 = vector.broadcast %cst_35 : f32 to vector<8x128xf32>
    %77 = arith.maximumf %75, %76 : vector<8x128xf32>
    %c2_i32_36 = arith.constant 2 : i32
    %78 = tpu.dynamic_rotate %77 by %c2_i32_36 dim 1 : vector<8x128xf32>, i32 -> vector<8x128xf32>
    %cst_37 = arith.constant 0.000000e+00 : f32
    %79 = vector.shape_cast %66 : vector<1x128xi1> to vector<1x128xi1>
    %80 = vector.broadcast %79 : vector<1x128xi1> to vector<8x128xi1>
    %81 = vector.broadcast %cst_37 : f32 to vector<8x128xf32>
    %82 = arith.select %80, %78, %81 : vector<8x128xi1>, vector<8x128xf32>
    %cst_38 = arith.constant dense<0.000000e+00> : vector<8x128xf32>
    %83 = tpu.matmul %61, %82, %cst_38 {dimension_numbers = #tpu.dot_dimension_numbers<[1], [0], [0], [1], [0, 0, 1, 1], [], []>} : vector<8x8xf32>, vector<8x128xf32>, vector<8x128xf32> -> vector<8x128xf32>
    %cst_39 = arith.constant dense<0.000000e+00> : vector<8x128xf32>
    %84 = tpu.matmul %62, %77, %cst_39 {dimension_numbers = #tpu.dot_dimension_numbers<[1], [0], [0], [1], [0, 0, 1, 1], [], []>} : vector<8x8xf32>, vector<8x128xf32>, vector<8x128xf32> -> vector<8x128xf32>
    %85 = arith.addf %83, %84 : vector<8x128xf32>
    %86 = vector.broadcast %63 : vector<8x1xf32> to vector<8x128xf32>
    %87 = arith.addf %85, %86 : vector<8x128xf32>
    %cst_40 = arith.constant 0.000000e+00 : f32
    %88 = vector.broadcast %cst_40 : f32 to vector<8x128xf32>
    %89 = arith.maximumf %87, %88 : vector<8x128xf32>
    %90 = arith.addf %89, %57 : vector<8x128xf32>
    %cst_41 = arith.constant 0.000000e+00 : f32
    %91 = vector.broadcast %cst_41 : f32 to vector<8x128xf32>
    %92 = arith.maximumf %90, %91 : vector<8x128xf32>
    %93 = tpu.iota {dimensions = array<i32: 0>} : vector<128x16xi32>
    %94 = tpu.iota {dimensions = array<i32: 1>} : vector<128x16xi32>
    %c8_i32_42 = arith.constant 8 : i32
    %95 = vector.broadcast %c8_i32_42 : i32 to vector<128x16xi32>
    %96 = arith.muli %94, %95 : vector<128x16xi32>
    %c7_i32 = arith.constant 7 : i32
    %97 = vector.broadcast %c7_i32 : i32 to vector<128x16xi32>
    %98 = arith.addi %96, %97 : vector<128x16xi32>
    %99 = arith.cmpi eq, %93, %98 : vector<128x16xi32>
    %cst_43 = arith.constant 1.000000e+00 : f32
    %cst_44 = arith.constant 0.000000e+00 : f32
    %100 = vector.broadcast %cst_43 : f32 to vector<128x16xf32>
    %101 = vector.broadcast %cst_44 : f32 to vector<128x16xf32>
    %102 = arith.select %99, %100, %101 : vector<128x16xi1>, vector<128x16xf32>
    %cst_45 = arith.constant dense<0.000000e+00> : vector<8x16xf32>
    %103 = tpu.matmul %92, %102, %cst_45 {dimension_numbers = #tpu.dot_dimension_numbers<[1], [0], [0], [1], [0, 0, 1, 1], [], []>} : vector<8x128xf32>, vector<128x16xf32>, vector<8x16xf32> -> vector<8x16xf32>
    %c112 = arith.constant 112 : index
    %c0_46 = arith.constant 0 : index
    %104 = vector.load %arg2[%c112, %c0_46] : memref<192x128xf32, #tpu.memory_space<vmem>>, vector<32x8xf32>
    %c144 = arith.constant 144 : index
    %c0_47 = arith.constant 0 : index
    %105 = vector.load %arg2[%c144, %c0_47] : memref<192x128xf32, #tpu.memory_space<vmem>>, vector<32x1xf32>
    %c176 = arith.constant 176 : index
    %c0_48 = arith.constant 0 : index
    %106 = vector.load %arg2[%c176, %c0_48] : memref<192x128xf32, #tpu.memory_space<vmem>>, vector<3x32xf32>
    %c184 = arith.constant 184 : index
    %c0_49 = arith.constant 0 : index
    %107 = vector.load %arg2[%c184, %c0_49] : memref<192x128xf32, #tpu.memory_space<vmem>>, vector<3x1xf32>
    %cst_50 = arith.constant dense<0.000000e+00> : vector<32x16xf32>
    %108 = tpu.matmul %104, %103, %cst_50 {dimension_numbers = #tpu.dot_dimension_numbers<[1], [0], [0], [1], [0, 0, 1, 1], [], []>} : vector<32x8xf32>, vector<8x16xf32>, vector<32x16xf32> -> vector<32x16xf32>
    %109 = vector.broadcast %105 : vector<32x1xf32> to vector<32x16xf32>
    %110 = arith.addf %108, %109 : vector<32x16xf32>
    %cst_51 = arith.constant 5.000000e-01 : f32
    %111 = vector.broadcast %cst_51 : f32 to vector<32x16xf32>
    %112 = arith.mulf %111, %110 : vector<32x16xf32>
    %cst_52 = arith.constant 0.707106769 : f32
    %113 = vector.broadcast %cst_52 : f32 to vector<32x16xf32>
    %114 = arith.mulf %110, %113 : vector<32x16xf32>
    %115 = math.absf %114 : vector<32x16xf32>
    %cst_53 = arith.constant 0.327591091 : f32
    %116 = vector.broadcast %cst_53 : f32 to vector<32x16xf32>
    %117 = arith.mulf %116, %115 : vector<32x16xf32>
    %cst_54 = arith.constant 1.000000e+00 : f32
    %118 = vector.broadcast %cst_54 : f32 to vector<32x16xf32>
    %119 = arith.addf %118, %117 : vector<32x16xf32>
    %cst_55 = arith.constant 1.000000e+00 : f32
    %120 = vector.broadcast %cst_55 : f32 to vector<32x16xf32>
    %121 = arith.divf %120, %119 : vector<32x16xf32>
    %cst_56 = arith.constant 1.06140542 : f32
    %122 = vector.broadcast %cst_56 : f32 to vector<32x16xf32>
    %123 = arith.mulf %122, %121 : vector<32x16xf32>
    %cst_57 = arith.constant -1.45315206 : f32
    %124 = vector.broadcast %cst_57 : f32 to vector<32x16xf32>
    %125 = arith.addf %123, %124 : vector<32x16xf32>
    %126 = arith.mulf %125, %121 : vector<32x16xf32>
    %cst_58 = arith.constant 1.42141378 : f32
    %127 = vector.broadcast %cst_58 : f32 to vector<32x16xf32>
    %128 = arith.addf %126, %127 : vector<32x16xf32>
    %129 = arith.mulf %128, %121 : vector<32x16xf32>
    %cst_59 = arith.constant -0.284496725 : f32
    %130 = vector.broadcast %cst_59 : f32 to vector<32x16xf32>
    %131 = arith.addf %129, %130 : vector<32x16xf32>
    %132 = arith.mulf %131, %121 : vector<32x16xf32>
    %cst_60 = arith.constant 0.254829586 : f32
    %133 = vector.broadcast %cst_60 : f32 to vector<32x16xf32>
    %134 = arith.addf %132, %133 : vector<32x16xf32>
    %135 = arith.mulf %134, %121 : vector<32x16xf32>
    %cst_61 = arith.constant 0.000000e+00 : f32
    %136 = vector.broadcast %cst_61 : f32 to vector<32x16xf32>
    %137 = arith.subf %136, %115 : vector<32x16xf32>
    %138 = arith.mulf %137, %115 : vector<32x16xf32>
    %139 = math.exp %138 : vector<32x16xf32>
    %140 = arith.mulf %135, %139 : vector<32x16xf32>
    %cst_62 = arith.constant 1.000000e+00 : f32
    %141 = vector.broadcast %cst_62 : f32 to vector<32x16xf32>
    %142 = arith.subf %141, %140 : vector<32x16xf32>
    %cst_63 = arith.constant 0.000000e+00 : f32
    %143 = vector.broadcast %cst_63 : f32 to vector<32x16xf32>
    %144 = arith.cmpf oge, %114, %143 : vector<32x16xf32>
    %cst_64 = arith.constant 0.000000e+00 : f32
    %145 = vector.broadcast %cst_64 : f32 to vector<32x16xf32>
    %146 = arith.subf %145, %142 : vector<32x16xf32>
    %147 = arith.select %144, %142, %146 : vector<32x16xi1>, vector<32x16xf32>
    %cst_65 = arith.constant 1.000000e+00 : f32
    %148 = vector.broadcast %cst_65 : f32 to vector<32x16xf32>
    %149 = arith.addf %148, %147 : vector<32x16xf32>
    %150 = arith.mulf %112, %149 : vector<32x16xf32>
    %cst_66 = arith.constant dense<0.000000e+00> : vector<3x16xf32>
    %151 = tpu.matmul %106, %150, %cst_66 {dimension_numbers = #tpu.dot_dimension_numbers<[1], [0], [0], [1], [0, 0, 1, 1], [], []>} : vector<3x32xf32>, vector<32x16xf32>, vector<3x16xf32> -> vector<3x16xf32>
    %152 = vector.broadcast %107 : vector<3x1xf32> to vector<3x16xf32>
    %153 = arith.addf %151, %152 : vector<3x16xf32>
    %154 = tpu.transpose %153, [1, 0] : vector<3x16xf32> -> vector<16x3xf32>
    %c0_67 = arith.constant 0 : index
    %c0_68 = arith.constant 0 : index
    %155 = vector.load %arg3[%c0_67, %c0_68] : memref<16x3xf32, #tpu.memory_space<vmem>>, vector<16x3xf32>
    tpu.vector_store %arg3[%c0_67, %c0_68], %154 {strides = array<i32>} : memref<16x3xf32, #tpu.memory_space<vmem>>, vector<16x3xf32>,
    return
  }
  func.func @transform_0(%arg0: i32) -> (i32, i32) {
    %c0_i32 = arith.constant 0 : i32
    %c0_i32_0 = arith.constant 0 : i32
    return %c0_i32, %arg0 : i32, i32
  }
  func.func @transform_1(%arg0: i32) -> (i32, i32) {
    %c0_i32 = arith.constant 0 : i32
    %c0_i32_0 = arith.constant 0 : i32
    %c0_i32_1 = arith.constant 0 : i32
    return %c0_i32, %c0_i32_0 : i32, i32
  }
  func.func @transform_2(%arg0: i32) -> (i32, i32) {
    %c0_i32 = arith.constant 0 : i32
    %c0_i32_0 = arith.constant 0 : i32
    return %arg0, %c0_i32 : i32, i32
  }
}

</mosaic_0001>

<llo_original>
// kernel: tpu_custom_call.1
$region0: #{tpu_custom_call.1}
  #allocation0 [shape = 'u32[]', space=smem, size = 0x4, offset = 0x4, fixed_abs, tag = 'smem constant byte address 0x4 - core index']
  #allocation1 [shape = 'u32[144,128]{1,0:T(1,128)}', space=vmem, size = 0x12000, scoped, tag = 'internal scratch']
  %s0 = inlined_call_operand.hbm [shape: f32[4,256], index: 0, kind: input, shape index: {}]
  %s1 = inlined_call_operand.hbm [shape: f32[192,128], index: 1, kind: input, shape index: {}]
  %s2 = inlined_call_operand.vmem [shape: f32[32,3], index: 2, kind: output, shape index: {}]
  %s3 = sld [smem:[#allocation0]]
  $region49: #{tpu_custom_call.1} parent=0
    _
  %s5 = ssub.s32 1, %s3
  %s6 = scalar_select 0, %s5, %s3
  $region1: #{tpu_custom_call.1} parent=0
    #allocation2 [shape = 'u8[4096]{0}', space=vmem, size = 0x1000, scoped, tag = 'input window, operand 0']
    #allocation3 [shape = 's32[2]{0}', space=sflag, size = 0x8, scoped, tag = 'scoped memory for tpu_custom_call.1']
    #allocation4 [shape = 'u8[98304]{0}', space=vmem, size = 0x18000, scoped, tag = 'input window, operand 1, single buffered']
    #allocation5 [shape = 's32[1]{0}', space=sflag, size = 0x4, scoped, tag = 'scoped memory for tpu_custom_call.1']
    %7 = vsyncpa [#allocation3], 0
    %s8 = scalar_lea.sflag [#allocation3], 1
    %9 = vsyncpa %s8, 0
    %10 = vsyncpa [#allocation5], 0
    loop: start=0, step=1, limit=4
    $region2: #{tpu_custom_call.1} parent=1 // loop_pre_header
      _
    $region3: #{tpu_custom_call.1} parent=1 // loop_header
      %s12 = sphi 0, %s16
      %p13 = scmp.ge.s32.totalorder %s12, 4
      %s22 = sphi 0, %s24
      %s25 = sphi 0, %s22
      %s26 = sphi 0, %s25
      %s42 = sphi 0, %s26
      %s46 = sphi 0, %s46
      %s48 = sphi 0, %s46
      %s49 = sphi 0, %s48
      %s63 = sphi 0, %s49
      %s69 = sphi 0, %s71
      %s72 = sphi 0, %s69
      %s73 = sphi 0, %s72
      %s89 = sphi 0, %s73
    $region4: #{tpu_custom_call.1} parent=1 // loop_header_branch
      %15 = sbr.rel (%p13) target = $region8
    $region5: #{tpu_custom_call.1} parent=1 // loop_body
      %s17 = ssub.s32 %s12, 1
      %s18 = ssub.s32 %s12, 2
      %s19 = sadd.s32 %s12, 1
      %s20 = ssub.s32 %s12, %s19
      %p21 = scmp.eq.s32.totalorder %s20, 0
      %s23 = sadd.s32 %s22, 1
      %s24 = scalar_select %p21, %s22, %s23
      %p27 = pneg %p21
      %p28 = scmp.eq.s32.totalorder %s12, 1
      %p29 = por %p27, %p28
      %p30 = scmp.ne.s32.totalorder %s22, %s25
      %p31 = scmp.eq.s32.totalorder %s12, 0
      %p32 = por %p30, %p31
      %p33 = scmp.ne.s32.totalorder %s22, %s25
      %p34 = scmp.eq.s32.totalorder %s17, 1
      %p35 = por %p33, %p34
      %p36 = scmp.ne.s32.totalorder %s25, %s26
      %p37 = scmp.eq.s32.totalorder %s17, 0
      %p38 = por %p36, %p37
      %p39 = scmp.ne.s32.totalorder %s25, %s26
      %p40 = scmp.eq.s32.totalorder %s18, 1
      %p41 = por %p39, %p40
      %p43 = scmp.ne.s32.totalorder %s26, %s42
      %p44 = scmp.eq.s32.totalorder %s18, 0
      %p45 = por %p43, %p44
      %s47 = sadd.s32 %s46, 1
      %p50 = scmp.eq.s32.totalorder %s12, 1
      %p51 = scmp.ne.s32.totalorder %s46, %s48
      %p52 = scmp.eq.s32.totalorder %s12, 0
      %p53 = por %p51, %p52
      %p54 = scmp.ne.s32.totalorder %s46, %s48
      %p55 = scmp.eq.s32.totalorder %s17, 1
      %p56 = por %p54, %p55
      %p57 = scmp.ne.s32.totalorder %s48, %s49
      %p58 = scmp.eq.s32.totalorder %s17, 0
      %p59 = por %p57, %p58
      %p60 = scmp.ne.s32.totalorder %s48, %s49
      %p61 = scmp.eq.s32.totalorder %s18, 1
      %p62 = por %p60, %p61
      %p64 = scmp.ne.s32.totalorder %s49, %s63
      %p65 = scmp.eq.s32.totalorder %s18, 0
      %p66 = por %p64, %p65
      %s67 = ssub.s32 %s12, %s19
      %p68 = scmp.eq.s32.totalorder %s67, 0
      %s70 = sadd.s32 %s69, 1
      %s71 = scalar_select %p68, %s69, %s70
      %p74 = pneg %p68
      %p75 = scmp.eq.s32.totalorder %s12, 1
      %p76 = por %p74, %p75
      %p77 = scmp.ne.s32.totalorder %s69, %s72
      %p78 = scmp.eq.s32.totalorder %s12, 0
      %p79 = por %p77, %p78
      %p80 = scmp.ne.s32.totalorder %s69, %s72
      %p81 = scmp.eq.s32.totalorder %s17, 1
      %p82 = por %p80, %p81
      %p83 = scmp.ne.s32.totalorder %s72, %s73
      %p84 = scmp.eq.s32.totalorder %s17, 0
      %p85 = por %p83, %p84
      %p86 = scmp.ne.s32.totalorder %s72, %s73
      %p87 = scmp.eq.s32.totalorder %s18, 1
      %p88 = por %p86, %p87
      %p90 = scmp.ne.s32.totalorder %s73, %s89
      %p91 = scmp.eq.s32.totalorder %s18, 0
      %p92 = por %p90, %p91
      %p93 = scmp.le.s32.totalorder 1, %s12
      %p94 = scmp.lt.s32.totalorder %s12, 3
      %p95 = pnand %p93, %p94
      %p96 = pneg %p95
      // Predicated region
      $region9: #{tpu_custom_call.1} parent=5 // pred_check
        _
      $region10: #{tpu_custom_call.1} parent=5 // pred_check_branch
        %98 = sbr.rel (%p95) target = $region12
      $region11: #{tpu_custom_call.1} parent=5 // pred_region
        %s99 = ssub.s32 %s12, 1
        // Predicated region
        $region13: #{tpu_custom_call.1} parent=11 // pred_check
          %p100 = pneg %p59
        $region14: #{tpu_custom_call.1} parent=11 // pred_check_branch
          %102 = sbr.rel (%p100) target = $region16
        $region15: #{tpu_custom_call.1} parent=11 // pred_region
          %s104 = ssub.s32 3072, 3072
          %105 = vsyncadd [#allocation5], %s104
          %s106 = sshll.u32 [#allocation4], 4
          %s107 = int_to_ptr.vmem [resolvable:$true] %s106
          %112 = dma.hbm_to_vmem [thread:$0]  %s1, 3072, %s107, [#allocation5], 128, 128, 8
        $region16: #{tpu_custom_call.1} parent=11 // pred_fallthru
          _
      $region12: #{tpu_custom_call.1} parent=5 // pred_fallthru
        _
      %p113 = scmp.lt.s32.totalorder %s12, 2
      // Predicated region
      $region17: #{tpu_custom_call.1} parent=5 // pred_check
        %p114 = pneg %p113
      $region18: #{tpu_custom_call.1} parent=5 // pred_check_branch
        %116 = sbr.rel (%p114) target = $region20
      $region19: #{tpu_custom_call.1} parent=5 // pred_region
        // Predicated region
        $region21: #{tpu_custom_call.1} parent=19 // pred_check
          %p117 = pneg %p32
        $region22: #{tpu_custom_call.1} parent=19 // pred_check_branch
          %119 = sbr.rel (%p117) target = $region24
        $region23: #{tpu_custom_call.1} parent=19 // pred_region
          %s120 = sand.u32 %s22, 1
          %s121 = scalar_lea.sflag [#allocation3], %s120
          %s122 = sand.u32 %s22, 1
          %s123 = smul.addr %s122, 4
          %s124 = scalar_lea.vmem [#allocation2], %s123
          %s126 = ssub.s32 64, 64
          %127 = vsyncadd %s121, %s126
          %s128 = smul.addr %s12, 64
          %s129 = scalar_lea.hbm %s0, %s128
          %s131 = sshll.u32 %s124, 4
          %s132 = int_to_ptr.vmem [resolvable:$true] %s131
          %134 = dma.hbm_to_vmem [thread:$0]  %s129, 64, %s132, %s121
        $region24: #{tpu_custom_call.1} parent=19 // pred_fallthru
          _
      $region20: #{tpu_custom_call.1} parent=5 // pred_fallthru
        _
      %p135 = scmp.le.s32.totalorder 1, %s12
      %p136 = scmp.lt.s32.totalorder %s12, 3
      %p137 = pnand %p135, %p136
      %p138 = pneg %p137
      // Predicated region
      $region25: #{tpu_custom_call.1} parent=5 // pred_check
        _
      $region26: #{tpu_custom_call.1} parent=5 // pred_check_branch
        %140 = sbr.rel (%p137) target = $region28
      $region27: #{tpu_custom_call.1} parent=5 // pred_region
        %s141 = ssub.s32 %s12, 1
        %s142 = sand.u32 %s25, 1
        %s143 = scalar_lea.sflag [#allocation3], %s142
        %s144 = sand.u32 %s25, 1
        %s145 = smul.addr %s144, 4
        %s146 = scalar_lea.vmem [#allocation2], %s145
        // Predicated region
        $region29: #{tpu_custom_call.1} parent=27 // pred_check
          %p147 = pneg %p38
        $region30: #{tpu_custom_call.1} parent=27 // pred_check_branch
          %149 = sbr.rel (%p147) target = $region32
        $region31: #{tpu_custom_call.1} parent=27 // pred_region
          %150 = dma.done %s143, 64
        $region32: #{tpu_custom_call.1} parent=27 // pred_fallthru
          _
        // Predicated region
        $region33: #{tpu_custom_call.1} parent=27 // pred_check
          %p151 = pneg %p59
        $region34: #{tpu_custom_call.1} parent=27 // pred_check_branch
          %153 = sbr.rel (%p151) target = $region36
        $region35: #{tpu_custom_call.1} parent=27 // pred_region
          %154 = dma.done [#allocation5], 3072
        $region36: #{tpu_custom_call.1} parent=27 // pred_fallthru
          _
        %s155 = sand.u32 %s25, 1
        %s156 = scalar_lea.sflag [#allocation3], %s155
        %s157 = sand.u32 %s25, 1
        %s158 = smul.addr %s157, 4
        %s159 = scalar_lea.vmem [#allocation2], %s158
        %p160 = pneg %p38
        %p161 = pneg %p35
        %p162 = pneg %p59
        %p163 = pneg %p56
        %p164 = pneg %p85
        %p165 = pneg %p82
        %s166 = smul.u32 2, %s17
        %p167 = scmp.lt.s32.totalorder %s166, 3
        %s168 = scalar_select %p167, %s166, 3
        %s169 = smul.addr %s168, 8
        %s170 = scalar_lea.vmem %s2, %s169
        %s171 = smul.u32 2, %s17
        %p172 = scmp.lt.s32.totalorder %s171, 3
        %s173 = scalar_select %p172, %s171, 3
        %s174 = smul.addr %s173, 8
        %s175 = scalar_lea.vmem %s2, %s174
        %s176 = smul.u32 2, %s17
        %v177 = vlaneseq
        %v178 = vand.u32 %v177, 127
        %vm179 = vcmp.lt.s32.totalorder %v178, 0
        %v180 = vsub.s32 0, %v178
        %v181 = vsel %vm179, %v180, %v178
        %v182 = vshrl.u32 %v181, 3
        %v183 = vand.u32 %v181, 7
        %v184 = vsub.s32 0, %v183
        %v185 = vsel %vm179, %v184, %v183
        %vm186 = vcmp.ne.s32.totalorder %v185, 0
        %vm187 = vcmp.lt.s32.totalorder %v185, 0
        %vm188 = vmand %vm187, %vm186
        %v189 = vadd.s32 %v185, 8
        %v190 = vsel %vm188, %v189, %v185
        %v191 = vld [vmem:[%s146] sm:$0xf]
        %v192 = vld [vmem:[#allocation4] sm:$0xff]
        %v193 = vld [vmem:[#allocation4 + $0x8] sm:$0xff]
        %v194 = vld [vmem:[#allocation4 + $0x10] sm:$0xff]
        %v195 = vld [vmem:[#allocation4 + $0x18] sm:$0xff]
        %v196 = vld [vmem:[#allocation4 + $0x20] sm:$0xff]
        %v197 = vld [vmem:[#allocation4 + $0x28] sm:$0xff]
        %v198 = vld [vmem:[#allocation4 + $0x30] sm:$0xff]
        %v199 = vld [vmem:[#allocation4 + $0x38] sm:$0xff]
        %200 = vrot.lane.b32.xlu0 %v191, 1
        %v201 = vpop.permute.xlu0 %200
        %vm202 = vcmp.ge.s32.totalorder %v190, 1
        %v203 = vsel %vm202, 1, 0
        %vm204 = vcmp.eq.s32.totalorder %v203, 1
        %v205 = vsel %vm204, %v201, 0.0
        %vm206 = vcmask 31744
        %v208 = vsel %vm206, %v193, 0
        %vm210 = vcmask 1043456
        %v212 = vsel %vm210, %v191, 0
        %214 = vmatprep.subr.mxu0 0.0
        %215 = vmatpush1.msra.mxu0 %v212
        %216 = vmatprep.subr.mxu0 0.0
        %217 = vmatpush1.msra.mxu0 0.0
        %218 = vmatprep.subr.mxu0 0.0
        %219 = vmatpush1.msra.mxu0 0.0
        %220 = vmatprep.subr.mxu0 0.0
        %221 = vmatpush1.msra.mxu0 0.0
        %222 = vmatprep.subr.mxu0 0.0
        %223 = vmatpush1.msra.mxu0 0.0
        %224 = vmatprep.subr.mxu0 0.0
        %225 = vmatpush1.msra.mxu0 0.0
        %226 = vmatprep.subr.mxu0 0.0
        %227 = vmatpush1.msra.mxu0 0.0
        %228 = vmatprep.subr.mxu0 0.0
        %229 = vmatpush1.msra.mxu0 0.0
        %230 = vmatprep.subr.mxu0 0.0
        %231 = vmatpush1.msra.mxu0 0.0
        %232 = vmatprep.subr.mxu0 0.0
        %233 = vmatpush1.msra.mxu0 0.0
        %234 = vmatprep.subr.mxu0 0.0
        %235 = vmatpush1.msra.mxu0 0.0
        %236 = vmatprep.subr.mxu0 0.0
        %237 = vmatpush1.msra.mxu0 0.0
        %238 = vmatprep.subr.mxu0 0.0
        %239 = vmatpush1.msra.mxu0 0.0
        %240 = vmatprep.subr.mxu0 0.0
        %241 = vmatpush1.msra.mxu0 0.0
        %242 = vmatprep.subr.mxu0 0.0
        %243 = vmatpush1.msra.mxu0 0.0
        %244 = vmatprep.subr.mxu0 0.0
        %245 = vmatpush1.msra.mxu0 0.0
        %246 = vmatprep.subr.mxu0 0.0
        %247 = vmatpush1.msra.mxu0 0.0
        %248 = vmatprep.subr.mxu0 0.0
        %249 = vmatpush1.msra.mxu0 0.0
        %250 = vmatprep.subr.mxu0 0.0
        %251 = vmatpush1.msra.mxu0 0.0
        %252 = vmatprep.subr.mxu0 0.0
        %253 = vmatpush1.msra.mxu0 0.0
        %254 = vmatprep.subr.mxu0 0.0
        %255 = vmatpush1.msra.mxu0 0.0
        %256 = vmatprep.subr.mxu0 0.0
        %257 = vmatpush1.msra.mxu0 0.0
        %258 = vmatprep.subr.mxu0 0.0
        %259 = vmatpush1.msra.mxu0 0.0
        %260 = vmatprep.subr.mxu0 0.0
        %261 = vmatpush1.msra.mxu0 0.0
        %262 = vmatprep.subr.mxu0 0.0
        %263 = vmatpush1.msra.mxu0 0.0
        %264 = vmatprep.subr.mxu0 0.0
        %265 = vmatpush1.msra.mxu0 0.0
        %266 = vmatprep.subr.mxu0 0.0
        %267 = vmatpush1.msra.mxu0 0.0
        %268 = vmatprep.subr.mxu0 0.0
        %269 = vmatpush1.msra.mxu0 0.0
        %270 = vmatprep.subr.mxu0 0.0
        %271 = vmatpush1.msra.mxu0 0.0
        %272 = vmatprep.subr.mxu0 0.0
        %273 = vmatpush1.msra.mxu0 0.0
        %274 = vmatprep.subr.mxu0 0.0
        %275 = vmatpush1.msra.mxu0 0.0
        %276 = vmatprep.subr.mxu0 0.0
        %277 = vmatpush1.msra.mxu0 0.0
        %278 = vmatprep.mubr.f32.mxu0 0.0
        %279 = vmatmul.mubr.f32.gmra.mrb[0].mxu0 %v208
        %v280 = vpop.f32.mrb[0].mxu0
        %v281 = vadd.f32 0.0, %v280
        %v282 = vpop.f32.mrb[0].mxu0
        %283 = vdwg.mxu0
        %v285 = vsel %vm206, %v192, 0
        %v288 = vsel %vm210, %v205, 0
        %290 = vmatprep.subr.mxu0 0.0
        %291 = vmatpush1.msra.mxu0 %v288
        %292 = vmatprep.subr.mxu0 0.0
        %293 = vmatpush1.msra.mxu0 0.0
        %294 = vmatprep.subr.mxu0 0.0
        %295 = vmatpush1.msra.mxu0 0.0
        %296 = vmatprep.subr.mxu0 0.0
        %297 = vmatpush1.msra.mxu0 0.0
        %298 = vmatprep.subr.mxu0 0.0
        %299 = vmatpush1.msra.mxu0 0.0
        %300 = vmatprep.subr.mxu0 0.0
        %301 = vmatpush1.msra.mxu0 0.0
        %302 = vmatprep.subr.mxu0 0.0
        %303 = vmatpush1.msra.mxu0 0.0
        %304 = vmatprep.subr.mxu0 0.0
        %305 = vmatpush1.msra.mxu0 0.0
        %306 = vmatprep.subr.mxu0 0.0
        %307 = vmatpush1.msra.mxu0 0.0
        %308 = vmatprep.subr.mxu0 0.0
        %309 = vmatpush1.msra.mxu0 0.0
        %310 = vmatprep.subr.mxu0 0.0
        %311 = vmatpush1.msra.mxu0 0.0
        %312 = vmatprep.subr.mxu0 0.0
        %313 = vmatpush1.msra.mxu0 0.0
        %314 = vmatprep.subr.mxu0 0.0
        %315 = vmatpush1.msra.mxu0 0.0
        %316 = vmatprep.subr.mxu0 0.0
        %317 = vmatpush1.msra.mxu0 0.0
        %318 = vmatprep.subr.mxu0 0.0
        %319 = vmatpush1.msra.mxu0 0.0
        %320 = vmatprep.subr.mxu0 0.0
        %321 = vmatpush1.msra.mxu0 0.0
        %322 = vmatprep.subr.mxu0 0.0
        %323 = vmatpush1.msra.mxu0 0.0
        %324 = vmatprep.subr.mxu0 0.0
        %325 = vmatpush1.msra.mxu0 0.0
        %326 = vmatprep.subr.mxu0 0.0
        %327 = vmatpush1.msra.mxu0 0.0
        %328 = vmatprep.subr.mxu0 0.0
        %329 = vmatpush1.msra.mxu0 0.0
        %330 = vmatprep.subr.mxu0 0.0
        %331 = vmatpush1.msra.mxu0 0.0
        %332 = vmatprep.subr.mxu0 0.0
        %333 = vmatpush1.msra.mxu0 0.0
        %334 = vmatprep.subr.mxu0 0.0
        %335 = vmatpush1.msra.mxu0 0.0
        %336 = vmatprep.subr.mxu0 0.0
        %337 = vmatpush1.msra.mxu0 0.0
        %338 = vmatprep.subr.mxu0 0.0
        %339 = vmatpush1.msra.mxu0 0.0
        %340 = vmatprep.subr.mxu0 0.0
        %341 = vmatpush1.msra.mxu0 0.0
        %342 = vmatprep.subr.mxu0 0.0
        %343 = vmatpush1.msra.mxu0 0.0
        %344 = vmatprep.subr.mxu0 0.0
        %345 = vmatpush1.msra.mxu0 0.0
        %346 = vmatprep.subr.mxu0 0.0
        %347 = vmatpush1.msra.mxu0 0.0
        %348 = vmatprep.subr.mxu0 0.0
        %349 = vmatpush1.msra.mxu0 0.0
        %350 = vmatprep.subr.mxu0 0.0
        %351 = vmatpush1.msra.mxu0 0.0
        %352 = vmatprep.subr.mxu0 0.0
        %353 = vmatpush1.msra.mxu0 0.0
        %354 = vmatprep.mubr.f32.mxu0 0.0
        %355 = vmatmul.mubr.f32.gmra.mrb[0].mxu0 %v285
        %v356 = vpop.f32.mrb[0].mxu0
        %v357 = vadd.f32 %v281, %v356
        %v358 = vpop.f32.mrb[0].mxu0
        %359 = vdwg.mxu0
        %361 = vset.pattern.permute.xlu0 0
        %362 = vperm.xlu0 %361, %v194
        %v363 = vpop.permute.xlu0 %362
        %v365 = vadd.f32 %v357, %v363
        %v366 = vmax.f32 %v365, 0.0
        %367 = vrot.lane.b32.xlu0 %v366, 1
        %v368 = vpop.permute.xlu0 %367
        %v369 = vsel %vm204, %v368, 0.0
        %vm370 = vcmask 64512
        %v372 = vsel %vm370, %v196, 0
        %374 = vmatprep.subr.mxu0 0.0
        %375 = vmatpush1.msra.mxu0 %v366
        %376 = vmatprep.subr.mxu0 0.0
        %377 = vmatpush1.msra.mxu0 0.0
        %378 = vmatprep.subr.mxu0 0.0
        %379 = vmatpush1.msra.mxu0 0.0
        %380 = vmatprep.subr.mxu0 0.0
        %381 = vmatpush1.msra.mxu0 0.0
        %382 = vmatprep.subr.mxu0 0.0
        %383 = vmatpush1.msra.mxu0 0.0
        %384 = vmatprep.subr.mxu0 0.0
        %385 = vmatpush1.msra.mxu0 0.0
        %386 = vmatprep.subr.mxu0 0.0
        %387 = vmatpush1.msra.mxu0 0.0
        %388 = vmatprep.subr.mxu0 0.0
        %389 = vmatpush1.msra.mxu0 0.0
        %390 = vmatprep.subr.mxu0 0.0
        %391 = vmatpush1.msra.mxu0 0.0
        %392 = vmatprep.subr.mxu0 0.0
        %393 = vmatpush1.msra.mxu0 0.0
        %394 = vmatprep.subr.mxu0 0.0
        %395 = vmatpush1.msra.mxu0 0.0
        %396 = vmatprep.subr.mxu0 0.0
        %397 = vmatpush1.msra.mxu0 0.0
        %398 = vmatprep.subr.mxu0 0.0
        %399 = vmatpush1.msra.mxu0 0.0
        %400 = vmatprep.subr.mxu0 0.0
        %401 = vmatpush1.msra.mxu0 0.0
        %402 = vmatprep.subr.mxu0 0.0
        %403 = vmatpush1.msra.mxu0 0.0
        %404 = vmatprep.subr.mxu0 0.0
        %405 = vmatpush1.msra.mxu0 0.0
        %406 = vmatprep.subr.mxu0 0.0
        %407 = vmatpush1.msra.mxu0 0.0
        %408 = vmatprep.subr.mxu0 0.0
        %409 = vmatpush1.msra.mxu0 0.0
        %410 = vmatprep.subr.mxu0 0.0
        %411 = vmatpush1.msra.mxu0 0.0
        %412 = vmatprep.subr.mxu0 0.0
        %413 = vmatpush1.msra.mxu0 0.0
        %414 = vmatprep.subr.mxu0 0.0
        %415 = vmatpush1.msra.mxu0 0.0
        %416 = vmatprep.subr.mxu0 0.0
        %417 = vmatpush1.msra.mxu0 0.0
        %418 = vmatprep.subr.mxu0 0.0
        %419 = vmatpush1.msra.mxu0 0.0
        %420 = vmatprep.subr.mxu0 0.0
        %421 = vmatpush1.msra.mxu0 0.0
        %422 = vmatprep.subr.mxu0 0.0
        %423 = vmatpush1.msra.mxu0 0.0
        %424 = vmatprep.subr.mxu0 0.0
        %425 = vmatpush1.msra.mxu0 0.0
        %426 = vmatprep.subr.mxu0 0.0
        %427 = vmatpush1.msra.mxu0 0.0
        %428 = vmatprep.subr.mxu0 0.0
        %429 = vmatpush1.msra.mxu0 0.0
        %430 = vmatprep.subr.mxu0 0.0
        %431 = vmatpush1.msra.mxu0 0.0
        %432 = vmatprep.subr.mxu0 0.0
        %433 = vmatpush1.msra.mxu0 0.0
        %434 = vmatprep.subr.mxu0 0.0
        %435 = vmatpush1.msra.mxu0 0.0
        %436 = vmatprep.subr.mxu0 0.0
        %437 = vmatpush1.msra.mxu0 0.0
        %438 = vmatprep.mubr.f32.mxu0 0.0
        %439 = vmatmul.mubr.f32.gmra.mrb[0].mxu0 %v372
        %v440 = vpop.f32.mrb[0].mxu0
        %v441 = vadd.f32 0.0, %v440
        %v442 = vpop.f32.mrb[0].mxu0
        %443 = vdwg.mxu0
        %v445 = vsel %vm370, %v195, 0
        %447 = vmatprep.subr.mxu0 0.0
        %448 = vmatpush1.msra.mxu0 %v369
        %449 = vmatprep.subr.mxu0 0.0
        %450 = vmatpush1.msra.mxu0 0.0
        %451 = vmatprep.subr.mxu0 0.0
        %452 = vmatpush1.msra.mxu0 0.0
        %453 = vmatprep.subr.mxu0 0.0
        %454 = vmatpush1.msra.mxu0 0.0
        %455 = vmatprep.subr.mxu0 0.0
        %456 = vmatpush1.msra.mxu0 0.0
        %457 = vmatprep.subr.mxu0 0.0
        %458 = vmatpush1.msra.mxu0 0.0
        %459 = vmatprep.subr.mxu0 0.0
        %460 = vmatpush1.msra.mxu0 0.0
        %461 = vmatprep.subr.mxu0 0.0
        %462 = vmatpush1.msra.mxu0 0.0
        %463 = vmatprep.subr.mxu0 0.0
        %464 = vmatpush1.msra.mxu0 0.0
        %465 = vmatprep.subr.mxu0 0.0
        %466 = vmatpush1.msra.mxu0 0.0
        %467 = vmatprep.subr.mxu0 0.0
        %468 = vmatpush1.msra.mxu0 0.0
        %469 = vmatprep.subr.mxu0 0.0
        %470 = vmatpush1.msra.mxu0 0.0
        %471 = vmatprep.subr.mxu0 0.0
        %472 = vmatpush1.msra.mxu0 0.0
        %473 = vmatprep.subr.mxu0 0.0
        %474 = vmatpush1.msra.mxu0 0.0
        %475 = vmatprep.subr.mxu0 0.0
        %476 = vmatpush1.msra.mxu0 0.0
        %477 = vmatprep.subr.mxu0 0.0
        %478 = vmatpush1.msra.mxu0 0.0
        %479 = vmatprep.subr.mxu0 0.0
        %480 = vmatpush1.msra.mxu0 0.0
        %481 = vmatprep.subr.mxu0 0.0
        %482 = vmatpush1.msra.mxu0 0.0
        %483 = vmatprep.subr.mxu0 0.0
        %484 = vmatpush1.msra.mxu0 0.0
        %485 = vmatprep.subr.mxu0 0.0
        %486 = vmatpush1.msra.mxu0 0.0
        %487 = vmatprep.subr.mxu0 0.0
        %488 = vmatpush1.msra.mxu0 0.0
        %489 = vmatprep.subr.mxu0 0.0
        %490 = vmatpush1.msra.mxu0 0.0
        %491 = vmatprep.subr.mxu0 0.0
        %492 = vmatpush1.msra.mxu0 0.0
        %493 = vmatprep.subr.mxu0 0.0
        %494 = vmatpush1.msra.mxu0 0.0
        %495 = vmatprep.subr.mxu0 0.0
        %496 = vmatpush1.msra.mxu0 0.0
        %497 = vmatprep.subr.mxu0 0.0
        %498 = vmatpush1.msra.mxu0 0.0
        %499 = vmatprep.subr.mxu0 0.0
        %500 = vmatpush1.msra.mxu0 0.0
        %501 = vmatprep.subr.mxu0 0.0
        %502 = vmatpush1.msra.mxu0 0.0
        %503 = vmatprep.subr.mxu0 0.0
        %504 = vmatpush1.msra.mxu0 0.0
        %505 = vmatprep.subr.mxu0 0.0
        %506 = vmatpush1.msra.mxu0 0.0
        %507 = vmatprep.subr.mxu0 0.0
        %508 = vmatpush1.msra.mxu0 0.0
        %509 = vmatprep.subr.mxu0 0.0
        %510 = vmatpush1.msra.mxu0 0.0
        %511 = vmatprep.mubr.f32.mxu0 0.0
        %512 = vmatmul.mubr.f32.gmra.mrb[0].mxu0 %v445
        %v513 = vpop.f32.mrb[0].mxu0
        %v514 = vadd.f32 %v441, %v513
        %v515 = vpop.f32.mrb[0].mxu0
        %516 = vdwg.mxu0
        %518 = vset.pattern.permute.xlu0 0
        %519 = vperm.xlu0 %518, %v197
        %v520 = vpop.permute.xlu0 %519
        %v522 = vadd.f32 %v514, %v520
        %v523 = vmax.f32 %v522, 0.0
        %525 = vset.pattern.permute.xlu0 0
        %526 = vperm.xlu0 %525, %v199
        %v527 = vpop.permute.xlu0 %526
        %v530 = vsel %vm206, %v198, 0
        %532 = vmatprep.subr.mxu0 0.0
        %533 = vmatpush1.msra.mxu0 %v212
        %534 = vmatprep.subr.mxu0 0.0
        %535 = vmatpush1.msra.mxu0 0.0
        %536 = vmatprep.subr.mxu0 0.0
        %537 = vmatpush1.msra.mxu0 0.0
        %538 = vmatprep.subr.mxu0 0.0
        %539 = vmatpush1.msra.mxu0 0.0
        %540 = vmatprep.subr.mxu0 0.0
        %541 = vmatpush1.msra.mxu0 0.0
        %542 = vmatprep.subr.mxu0 0.0
        %543 = vmatpush1.msra.mxu0 0.0
        %544 = vmatprep.subr.mxu0 0.0
        %545 = vmatpush1.msra.mxu0 0.0
        %546 = vmatprep.subr.mxu0 0.0
        %547 = vmatpush1.msra.mxu0 0.0
        %548 = vmatprep.subr.mxu0 0.0
        %549 = vmatpush1.msra.mxu0 0.0
        %550 = vmatprep.subr.mxu0 0.0
        %551 = vmatpush1.msra.mxu0 0.0
        %552 = vmatprep.subr.mxu0 0.0
        %553 = vmatpush1.msra.mxu0 0.0
        %554 = vmatprep.subr.mxu0 0.0
        %555 = vmatpush1.msra.mxu0 0.0
        %556 = vmatprep.subr.mxu0 0.0
        %557 = vmatpush1.msra.mxu0 0.0
        %558 = vmatprep.subr.mxu0 0.0
        %559 = vmatpush1.msra.mxu0 0.0
        %560 = vmatprep.subr.mxu0 0.0
        %561 = vmatpush1.msra.mxu0 0.0
        %562 = vmatprep.subr.mxu0 0.0
        %563 = vmatpush1.msra.mxu0 0.0
        %564 = vmatprep.subr.mxu0 0.0
        %565 = vmatpush1.msra.mxu0 0.0
        %566 = vmatprep.subr.mxu0 0.0
        %567 = vmatpush1.msra.mxu0 0.0
        %568 = vmatprep.subr.mxu0 0.0
        %569 = vmatpush1.msra.mxu0 0.0
        %570 = vmatprep.subr.mxu0 0.0
        %571 = vmatpush1.msra.mxu0 0.0
        %572 = vmatprep.subr.mxu0 0.0
        %573 = vmatpush1.msra.mxu0 0.0
        %574 = vmatprep.subr.mxu0 0.0
        %575 = vmatpush1.msra.mxu0 0.0
        %576 = vmatprep.subr.mxu0 0.0
        %577 = vmatpush1.msra.mxu0 0.0
        %578 = vmatprep.subr.mxu0 0.0
        %579 = vmatpush1.msra.mxu0 0.0
        %580 = vmatprep.subr.mxu0 0.0
        %581 = vmatpush1.msra.mxu0 0.0
        %582 = vmatprep.subr.mxu0 0.0
        %583 = vmatpush1.msra.mxu0 0.0
        %584 = vmatprep.subr.mxu0 0.0
        %585 = vmatpush1.msra.mxu0 0.0
        %586 = vmatprep.subr.mxu0 0.0
        %587 = vmatpush1.msra.mxu0 0.0
        %588 = vmatprep.subr.mxu0 0.0
        %589 = vmatpush1.msra.mxu0 0.0
        %590 = vmatprep.subr.mxu0 0.0
        %591 = vmatpush1.msra.mxu0 0.0
        %592 = vmatprep.subr.mxu0 0.0
        %593 = vmatpush1.msra.mxu0 0.0
        %594 = vmatprep.subr.mxu0 0.0
        %595 = vmatpush1.msra.mxu0 0.0
        %596 = vmatprep.mubr.f32.mxu0 0.0
        %597 = vmatmul.mubr.f32.gmra.mrb[0].mxu0 %v530
        %v598 = vpop.f32.mrb[0].mxu0
        %v599 = vadd.f32 %v527, %v598
        %v600 = vpop.f32.mrb[0].mxu0
        %601 = vdwg.mxu0
        %v602 = vadd.f32 %v523, %v599
        %v603 = vmax.f32 %v602, 0.0
        %v604 = vld [vmem:[#allocation4 + $0x40] sm:$0xff]
        %v605 = vld [vmem:[#allocation4 + $0x48] sm:$0xff]
        %v606 = vld [vmem:[#allocation4 + $0x50] sm:$0xff]
        %v607 = vld [vmem:[#allocation4 + $0x58] sm:$0xff]
        %v608 = vld [vmem:[#allocation4 + $0x60] sm:$0xff]
        %v609 = vld [vmem:[#allocation4 + $0x68] sm:$0xff]
        %610 = vrot.lane.b32.xlu0 %v603, 2
        %v611 = vpop.permute.xlu0 %610
        %vm612 = vcmp.ge.s32.totalorder %v190, 2
        %v613 = vsel %vm612, 1, 0
        %vm614 = vcmp.eq.s32.totalorder %v613, 1
        %v615 = vsel %vm614, %v611, 0.0
        %v617 = vsel %vm370, %v605, 0
        %619 = vmatprep.subr.mxu0 0.0
        %620 = vmatpush1.msra.mxu0 %v603
        %621 = vmatprep.subr.mxu0 0.0
        %622 = vmatpush1.msra.mxu0 0.0
        %623 = vmatprep.subr.mxu0 0.0
        %624 = vmatpush1.msra.mxu0 0.0
        %625 = vmatprep.subr.mxu0 0.0
        %626 = vmatpush1.msra.mxu0 0.0
        %627 = vmatprep.subr.mxu0 0.0
        %628 = vmatpush1.msra.mxu0 0.0
        %629 = vmatprep.subr.mxu0 0.0
        %630 = vmatpush1.msra.mxu0 0.0
        %631 = vmatprep.subr.mxu0 0.0
        %632 = vmatpush1.msra.mxu0 0.0
        %633 = vmatprep.subr.mxu0 0.0
        %634 = vmatpush1.msra.mxu0 0.0
        %635 = vmatprep.subr.mxu0 0.0
        %636 = vmatpush1.msra.mxu0 0.0
        %637 = vmatprep.subr.mxu0 0.0
        %638 = vmatpush1.msra.mxu0 0.0
        %639 = vmatprep.subr.mxu0 0.0
        %640 = vmatpush1.msra.mxu0 0.0
        %641 = vmatprep.subr.mxu0 0.0
        %642 = vmatpush1.msra.mxu0 0.0
        %643 = vmatprep.subr.mxu0 0.0
        %644 = vmatpush1.msra.mxu0 0.0
        %645 = vmatprep.subr.mxu0 0.0
        %646 = vmatpush1.msra.mxu0 0.0
        %647 = vmatprep.subr.mxu0 0.0
        %648 = vmatpush1.msra.mxu0 0.0
        %649 = vmatprep.subr.mxu0 0.0
        %650 = vmatpush1.msra.mxu0 0.0
        %651 = vmatprep.subr.mxu0 0.0
        %652 = vmatpush1.msra.mxu0 0.0
        %653 = vmatprep.subr.mxu0 0.0
        %654 = vmatpush1.msra.mxu0 0.0
        %655 = vmatprep.subr.mxu0 0.0
        %656 = vmatpush1.msra.mxu0 0.0
        %657 = vmatprep.subr.mxu0 0.0
        %658 = vmatpush1.msra.mxu0 0.0
        %659 = vmatprep.subr.mxu0 0.0
        %660 = vmatpush1.msra.mxu0 0.0
        %661 = vmatprep.subr.mxu0 0.0
        %662 = vmatpush1.msra.mxu0 0.0
        %663 = vmatprep.subr.mxu0 0.0
        %664 = vmatpush1.msra.mxu0 0.0
        %665 = vmatprep.subr.mxu0 0.0
        %666 = vmatpush1.msra.mxu0 0.0
        %667 = vmatprep.subr.mxu0 0.0
        %668 = vmatpush1.msra.mxu0 0.0
        %669 = vmatprep.subr.mxu0 0.0
        %670 = vmatpush1.msra.mxu0 0.0
        %671 = vmatprep.subr.mxu0 0.0
        %672 = vmatpush1.msra.mxu0 0.0
        %673 = vmatprep.subr.mxu0 0.0
        %674 = vmatpush1.msra.mxu0 0.0
        %675 = vmatprep.subr.mxu0 0.0
        %676 = vmatpush1.msra.mxu0 0.0
        %677 = vmatprep.subr.mxu0 0.0
        %678 = vmatpush1.msra.mxu0 0.0
        %679 = vmatprep.subr.mxu0 0.0
        %680 = vmatpush1.msra.mxu0 0.0
        %681 = vmatprep.subr.mxu0 0.0
        %682 = vmatpush1.msra.mxu0 0.0
        %683 = vmatprep.mubr.f32.mxu0 0.0
        %684 = vmatmul.mubr.f32.gmra.mrb[0].mxu0 %v617
        %v685 = vpop.f32.mrb[0].mxu0
        %v686 = vadd.f32 0.0, %v685
        %v687 = vpop.f32.mrb[0].mxu0
        %688 = vdwg.mxu0
        %v690 = vsel %vm370, %v604, 0
        %692 = vmatprep.subr.mxu0 0.0
        %693 = vmatpush1.msra.mxu0 %v615
        %694 = vmatprep.subr.mxu0 0.0
        %695 = vmatpush1.msra.mxu0 0.0
        %696 = vmatprep.subr.mxu0 0.0
        %697 = vmatpush1.msra.mxu0 0.0
        %698 = vmatprep.subr.mxu0 0.0
        %699 = vmatpush1.msra.mxu0 0.0
        %700 = vmatprep.subr.mxu0 0.0
        %701 = vmatpush1.msra.mxu0 0.0
        %702 = vmatprep.subr.mxu0 0.0
        %703 = vmatpush1.msra.mxu0 0.0
        %704 = vmatprep.subr.mxu0 0.0
        %705 = vmatpush1.msra.mxu0 0.0
        %706 = vmatprep.subr.mxu0 0.0
        %707 = vmatpush1.msra.mxu0 0.0
        %708 = vmatprep.subr.mxu0 0.0
        %709 = vmatpush1.msra.mxu0 0.0
        %710 = vmatprep.subr.mxu0 0.0
        %711 = vmatpush1.msra.mxu0 0.0
        %712 = vmatprep.subr.mxu0 0.0
        %713 = vmatpush1.msra.mxu0 0.0
        %714 = vmatprep.subr.mxu0 0.0
        %715 = vmatpush1.msra.mxu0 0.0
        %716 = vmatprep.subr.mxu0 0.0
        %717 = vmatpush1.msra.mxu0 0.0
        %718 = vmatprep.subr.mxu0 0.0
        %719 = vmatpush1.msra.mxu0 0.0
        %720 = vmatprep.subr.mxu0 0.0
        %721 = vmatpush1.msra.mxu0 0.0
        %722 = vmatprep.subr.mxu0 0.0
        %723 = vmatpush1.msra.mxu0 0.0
        %724 = vmatprep.subr.mxu0 0.0
        %725 = vmatpush1.msra.mxu0 0.0
        %726 = vmatprep.subr.mxu0 0.0
        %727 = vmatpush1.msra.mxu0 0.0
        %728 = vmatprep.subr.mxu0 0.0
        %729 = vmatpush1.msra.mxu0 0.0
        %730 = vmatprep.subr.mxu0 0.0
        %731 = vmatpush1.msra.mxu0 0.0
        %732 = vmatprep.subr.mxu0 0.0
        %733 = vmatpush1.msra.mxu0 0.0
        %734 = vmatprep.subr.mxu0 0.0
        %735 = vmatpush1.msra.mxu0 0.0
        %736 = vmatprep.subr.mxu0 0.0
        %737 = vmatpush1.msra.mxu0 0.0
        %738 = vmatprep.subr.mxu0 0.0
        %739 = vmatpush1.msra.mxu0 0.0
        %740 = vmatprep.subr.mxu0 0.0
        %741 = vmatpush1.msra.mxu0 0.0
        %742 = vmatprep.subr.mxu0 0.0
        %743 = vmatpush1.msra.mxu0 0.0
        %744 = vmatprep.subr.mxu0 0.0
        %745 = vmatpush1.msra.mxu0 0.0
        %746 = vmatprep.subr.mxu0 0.0
        %747 = vmatpush1.msra.mxu0 0.0
        %748 = vmatprep.subr.mxu0 0.0
        %749 = vmatpush1.msra.mxu0 0.0
        %750 = vmatprep.subr.mxu0 0.0
        %751 = vmatpush1.msra.mxu0 0.0
        %752 = vmatprep.subr.mxu0 0.0
        %753 = vmatpush1.msra.mxu0 0.0
        %754 = vmatprep.subr.mxu0 0.0
        %755 = vmatpush1.msra.mxu0 0.0
        %756 = vmatprep.mubr.f32.mxu0 0.0
        %757 = vmatmul.mubr.f32.gmra.mrb[0].mxu0 %v690
        %v758 = vpop.f32.mrb[0].mxu0
        %v759 = vadd.f32 %v686, %v758
        %v760 = vpop.f32.mrb[0].mxu0
        %761 = vdwg.mxu0
        %763 = vset.pattern.permute.xlu0 0
        %764 = vperm.xlu0 %763, %v606
        %v765 = vpop.permute.xlu0 %764
        %v767 = vadd.f32 %v759, %v765
        %v768 = vmax.f32 %v767, 0.0
        %769 = vrot.lane.b32.xlu0 %v768, 2
        %v770 = vpop.permute.xlu0 %769
        %v771 = vsel %vm614, %v770, 0.0
        %v773 = vsel %vm370, %v608, 0
        %775 = vmatprep.subr.mxu0 0.0
        %776 = vmatpush1.msra.mxu0 %v768
        %777 = vmatprep.subr.mxu0 0.0
        %778 = vmatpush1.msra.mxu0 0.0
        %779 = vmatprep.subr.mxu0 0.0
        %780 = vmatpush1.msra.mxu0 0.0
        %781 = vmatprep.subr.mxu0 0.0
        %782 = vmatpush1.msra.mxu0 0.0
        %783 = vmatprep.subr.mxu0 0.0
        %784 = vmatpush1.msra.mxu0 0.0
        %785 = vmatprep.subr.mxu0 0.0
        %786 = vmatpush1.msra.mxu0 0.0
        %787 = vmatprep.subr.mxu0 0.0
        %788 = vmatpush1.msra.mxu0 0.0
        %789 = vmatprep.subr.mxu0 0.0
        %790 = vmatpush1.msra.mxu0 0.0
        %791 = vmatprep.subr.mxu0 0.0
        %792 = vmatpush1.msra.mxu0 0.0
        %793 = vmatprep.subr.mxu0 0.0
        %794 = vmatpush1.msra.mxu0 0.0
        %795 = vmatprep.subr.mxu0 0.0
        %796 = vmatpush1.msra.mxu0 0.0
        %797 = vmatprep.subr.mxu0 0.0
        %798 = vmatpush1.msra.mxu0 0.0
        %799 = vmatprep.subr.mxu0 0.0
        %800 = vmatpush1.msra.mxu0 0.0
        %801 = vmatprep.subr.mxu0 0.0
        %802 = vmatpush1.msra.mxu0 0.0
        %803 = vmatprep.subr.mxu0 0.0
        %804 = vmatpush1.msra.mxu0 0.0
        %805 = vmatprep.subr.mxu0 0.0
        %806 = vmatpush1.msra.mxu0 0.0
        %807 = vmatprep.subr.mxu0 0.0
        %808 = vmatpush1.msra.mxu0 0.0
        %809 = vmatprep.subr.mxu0 0.0
        %810 = vmatpush1.msra.mxu0 0.0
        %811 = vmatprep.subr.mxu0 0.0
        %812 = vmatpush1.msra.mxu0 0.0
        %813 = vmatprep.subr.mxu0 0.0
        %814 = vmatpush1.msra.mxu0 0.0
        %815 = vmatprep.subr.mxu0 0.0
        %816 = vmatpush1.msra.mxu0 0.0
        %817 = vmatprep.subr.mxu0 0.0
        %818 = vmatpush1.msra.mxu0 0.0
        %819 = vmatprep.subr.mxu0 0.0
        %820 = vmatpush1.msra.mxu0 0.0
        %821 = vmatprep.subr.mxu0 0.0
        %822 = vmatpush1.msra.mxu0 0.0
        %823 = vmatprep.subr.mxu0 0.0
        %824 = vmatpush1.msra.mxu0 0.0
        %825 = vmatprep.subr.mxu0 0.0
        %826 = vmatpush1.msra.mxu0 0.0
        %827 = vmatprep.subr.mxu0 0.0
        %828 = vmatpush1.msra.mxu0 0.0
        %829 = vmatprep.subr.mxu0 0.0
        %830 = vmatpush1.msra.mxu0 0.0
        %831 = vmatprep.subr.mxu0 0.0
        %832 = vmatpush1.msra.mxu0 0.0
        %833 = vmatprep.subr.mxu0 0.0
        %834 = vmatpush1.msra.mxu0 0.0
        %835 = vmatprep.subr.mxu0 0.0
        %836 = vmatpush1.msra.mxu0 0.0
        %837 = vmatprep.subr.mxu0 0.0
        %838 = vmatpush1.msra.mxu0 0.0
        %839 = vmatprep.mubr.f32.mxu0 0.0
        %840 = vmatmul.mubr.f32.gmra.mrb[0].mxu0 %v773
        %v841 = vpop.f32.mrb[0].mxu0
        %v842 = vadd.f32 0.0, %v841
        %v843 = vpop.f32.mrb[0].mxu0
        %844 = vdwg.mxu0
        %v846 = vsel %vm370, %v607, 0
        %848 = vmatprep.subr.mxu0 0.0
        %849 = vmatpush1.msra.mxu0 %v771
        %850 = vmatprep.subr.mxu0 0.0
        %851 = vmatpush1.msra.mxu0 0.0
        %852 = vmatprep.subr.mxu0 0.0
        %853 = vmatpush1.msra.mxu0 0.0
        %854 = vmatprep.subr.mxu0 0.0
        %855 = vmatpush1.msra.mxu0 0.0
        %856 = vmatprep.subr.mxu0 0.0
        %857 = vmatpush1.msra.mxu0 0.0
        %858 = vmatprep.subr.mxu0 0.0
        %859 = vmatpush1.msra.mxu0 0.0
        %860 = vmatprep.subr.mxu0 0.0
        %861 = vmatpush1.msra.mxu0 0.0
        %862 = vmatprep.subr.mxu0 0.0
        %863 = vmatpush1.msra.mxu0 0.0
        %864 = vmatprep.subr.mxu0 0.0
        %865 = vmatpush1.msra.mxu0 0.0
        %866 = vmatprep.subr.mxu0 0.0
        %867 = vmatpush1.msra.mxu0 0.0
        %868 = vmatprep.subr.mxu0 0.0
        %869 = vmatpush1.msra.mxu0 0.0
        %870 = vmatprep.subr.mxu0 0.0
        %871 = vmatpush1.msra.mxu0 0.0
        %872 = vmatprep.subr.mxu0 0.0
        %873 = vmatpush1.msra.mxu0 0.0
        %874 = vmatprep.subr.mxu0 0.0
        %875 = vmatpush1.msra.mxu0 0.0
        %876 = vmatprep.subr.mxu0 0.0
        %877 = vmatpush1.msra.mxu0 0.0
        %878 = vmatprep.subr.mxu0 0.0
        %879 = vmatpush1.msra.mxu0 0.0
        %880 = vmatprep.subr.mxu0 0.0
        %881 = vmatpush1.msra.mxu0 0.0
        %882 = vmatprep.subr.mxu0 0.0
        %883 = vmatpush1.msra.mxu0 0.0
        %884 = vmatprep.subr.mxu0 0.0
        %885 = vmatpush1.msra.mxu0 0.0
        %886 = vmatprep.subr.mxu0 0.0
        %887 = vmatpush1.msra.mxu0 0.0
        %888 = vmatprep.subr.mxu0 0.0
        %889 = vmatpush1.msra.mxu0 0.0
        %890 = vmatprep.subr.mxu0 0.0
        %891 = vmatpush1.msra.mxu0 0.0
        %892 = vmatprep.subr.mxu0 0.0
        %893 = vmatpush1.msra.mxu0 0.0
        %894 = vmatprep.subr.mxu0 0.0
        %895 = vmatpush1.msra.mxu0 0.0
        %896 = vmatprep.subr.mxu0 0.0
        %897 = vmatpush1.msra.mxu0 0.0
        %898 = vmatprep.subr.mxu0 0.0
        %899 = vmatpush1.msra.mxu0 0.0
        %900 = vmatprep.subr.mxu0 0.0
        %901 = vmatpush1.msra.mxu0 0.0
        %902 = vmatprep.subr.mxu0 0.0
        %903 = vmatpush1.msra.mxu0 0.0
        %904 = vmatprep.subr.mxu0 0.0
        %905 = vmatpush1.msra.mxu0 0.0
        %906 = vmatprep.subr.mxu0 0.0
        %907 = vmatpush1.msra.mxu0 0.0
        %908 = vmatprep.subr.mxu0 0.0
        %909 = vmatpush1.msra.mxu0 0.0
        %910 = vmatprep.subr.mxu0 0.0
        %911 = vmatpush1.msra.mxu0 0.0
        %912 = vmatprep.mubr.f32.mxu0 0.0
        %913 = vmatmul.mubr.f32.gmra.mrb[0].mxu0 %v846
        %v914 = vpop.f32.mrb[0].mxu0
        %v915 = vadd.f32 %v842, %v914
        %v916 = vpop.f32.mrb[0].mxu0
        %917 = vdwg.mxu0
        %919 = vset.pattern.permute.xlu0 0
        %920 = vperm.xlu0 %919, %v609
        %v921 = vpop.permute.xlu0 %920
        %v923 = vadd.f32 %v915, %v921
        %v924 = vmax.f32 %v923, 0.0
        %v925 = vadd.f32 %v924, %v603
        %v926 = vmax.f32 %v925, 0.0
        %v927 = vlaneseq
        %v928 = vshrl.u32 %v927, 7
        %v929 = vadd.s32 %v928, 8
        %v930 = vadd.s32 %v928, 16
        %v931 = vadd.s32 %v928, 24
        %v932 = vadd.s32 %v928, 32
        %v933 = vadd.s32 %v928, 40
        %v934 = vadd.s32 %v928, 48
        %v935 = vadd.s32 %v928, 56
        %v936 = vadd.s32 %v928, 64
        %v937 = vadd.s32 %v928, 72
        %v938 = vadd.s32 %v928, 80
        %v939 = vadd.s32 %v928, 88
        %v940 = vadd.s32 %v928, 96
        %v941 = vadd.s32 %v928, 104
        %v942 = vadd.s32 %v928, 112
        %v943 = vadd.s32 %v928, 120
        %v944 = vmul.u32 %v178, 8
        %v945 = vadd.s32 %v944, 7
        %vm946 = vcmp.eq.s32.totalorder %v928, %v945
        %vm947 = vcmp.eq.s32.totalorder %v929, %v945
        %vm948 = vcmp.eq.s32.totalorder %v930, %v945
        %vm949 = vcmp.eq.s32.totalorder %v931, %v945
        %vm950 = vcmp.eq.s32.totalorder %v932, %v945
        %vm951 = vcmp.eq.s32.totalorder %v933, %v945
        %vm952 = vcmp.eq.s32.totalorder %v934, %v945
        %vm953 = vcmp.eq.s32.totalorder %v935, %v945
        %vm954 = vcmp.eq.s32.totalorder %v936, %v945
        %vm955 = vcmp.eq.s32.totalorder %v937, %v945
        %vm956 = vcmp.eq.s32.totalorder %v938, %v945
        %vm957 = vcmp.eq.s32.totalorder %v939, %v945
        %vm958 = vcmp.eq.s32.totalorder %v940, %v945
        %vm959 = vcmp.eq.s32.totalorder %v941, %v945
        %vm960 = vcmp.eq.s32.totalorder %v942, %v945
        %vm961 = vcmp.eq.s32.totalorder %v943, %v945
        %v962 = vsel %vm946, 1.0, 0.0
        %v963 = vsel %vm947, 1.0, 0.0
        %v964 = vsel %vm948, 1.0, 0.0
        %v965 = vsel %vm949, 1.0, 0.0
        %v966 = vsel %vm950, 1.0, 0.0
        %v967 = vsel %vm951, 1.0, 0.0
        %v968 = vsel %vm952, 1.0, 0.0
        %v969 = vsel %vm953, 1.0, 0.0
        %v970 = vsel %vm954, 1.0, 0.0
        %v971 = vsel %vm955, 1.0, 0.0
        %v972 = vsel %vm956, 1.0, 0.0
        %v973 = vsel %vm957, 1.0, 0.0
        %v974 = vsel %vm958, 1.0, 0.0
        %v975 = vsel %vm959, 1.0, 0.0
        %v976 = vsel %vm960, 1.0, 0.0
        %v977 = vsel %vm961, 1.0, 0.0
        %978 = vmatprep.subr.mxu0 0.0
        %979 = vmatpush1.msra.mxu0 %v962
        %980 = vmatprep.subr.mxu0 0.0
        %981 = vmatpush1.msra.mxu0 %v963
        %982 = vmatprep.subr.mxu0 0.0
        %983 = vmatpush1.msra.mxu0 %v964
        %984 = vmatprep.subr.mxu0 0.0
        %985 = vmatpush1.msra.mxu0 %v965
        %986 = vmatprep.subr.mxu0 0.0
        %987 = vmatpush1.msra.mxu0 %v966
        %988 = vmatprep.subr.mxu0 0.0
        %989 = vmatpush1.msra.mxu0 %v967
        %990 = vmatprep.subr.mxu0 0.0
        %991 = vmatpush1.msra.mxu0 %v968
        %992 = vmatprep.subr.mxu0 0.0
        %993 = vmatpush1.msra.mxu0 %v969
        %994 = vmatprep.subr.mxu0 0.0
        %995 = vmatpush1.msra.mxu0 %v970
        %996 = vmatprep.subr.mxu0 0.0
        %997 = vmatpush1.msra.mxu0 %v971
        %998 = vmatprep.subr.mxu0 0.0
        %999 = vmatpush1.msra.mxu0 %v972
        %1000 = vmatprep.subr.mxu0 0.0
        %1001 = vmatpush1.msra.mxu0 %v973
        %1002 = vmatprep.subr.mxu0 0.0
        %1003 = vmatpush1.msra.mxu0 %v974
        %1004 = vmatprep.subr.mxu0 0.0
        %1005 = vmatpush1.msra.mxu0 %v975
        %1006 = vmatprep.subr.mxu0 0.0
        %1007 = vmatpush1.msra.mxu0 %v976
        %1008 = vmatprep.subr.mxu0 0.0
        %1009 = vmatpush1.msra.mxu0 %v977
        %1010 = vmatprep.subr.mxu0 0.0
        %1011 = vmatpush1.msra.mxu0 0.0
        %1012 = vmatprep.subr.mxu0 0.0
        %1013 = vmatpush1.msra.mxu0 0.0
        %1014 = vmatprep.subr.mxu0 0.0
        %1015 = vmatpush1.msra.mxu0 0.0
        %1016 = vmatprep.subr.mxu0 0.0
        %1017 = vmatpush1.msra.mxu0 0.0
        %1018 = vmatprep.subr.mxu0 0.0
        %1019 = vmatpush1.msra.mxu0 0.0
        %1020 = vmatprep.subr.mxu0 0.0
        %1021 = vmatpush1.msra.mxu0 0.0
        %1022 = vmatprep.subr.mxu0 0.0
        %1023 = vmatpush1.msra.mxu0 0.0
        %1024 = vmatprep.subr.mxu0 0.0
        %1025 = vmatpush1.msra.mxu0 0.0
        %1026 = vmatprep.subr.mxu0 0.0
        %1027 = vmatpush1.msra.mxu0 0.0
        %1028 = vmatprep.subr.mxu0 0.0
        %1029 = vmatpush1.msra.mxu0 0.0
        %1030 = vmatprep.subr.mxu0 0.0
        %1031 = vmatpush1.msra.mxu0 0.0
        %1032 = vmatprep.subr.mxu0 0.0
        %1033 = vmatpush1.msra.mxu0 0.0
        %1034 = vmatprep.subr.mxu0 0.0
        %1035 = vmatpush1.msra.mxu0 0.0
        %1036 = vmatprep.subr.mxu0 0.0
        %1037 = vmatpush1.msra.mxu0 0.0
        %1038 = vmatprep.subr.mxu0 0.0
        %1039 = vmatpush1.msra.mxu0 0.0
        %1040 = vmatprep.subr.mxu0 0.0
        %1041 = vmatpush1.msra.mxu0 0.0
        %1042 = vmatprep.mubr.f32.mxu0 0.0
        %1043 = vmatmul.mubr.f32.gmra.mrb[0].mxu0 %v926
        %v1044 = vpop.f32.mrb[0].mxu0
        %v1045 = vadd.f32 0.0, %v1044
        %v1046 = vpop.f32.mrb[0].mxu0
        %1047 = vdwg.mxu0
        %v1048 = vld [vmem:[#allocation4 + $0x70] sm:$0xff]
        %v1049 = vld [vmem:[#allocation4 + $0x78] sm:$0xff]
        %v1050 = vld [vmem:[#allocation4 + $0x80] sm:$0xff]
        %v1051 = vld [vmem:[#allocation4 + $0x88] sm:$0xff]
        %v1052 = vld [vmem:[#allocation4 + $0x90] sm:$0xff]
        %v1053 = vld [vmem:[#allocation4 + $0x98] sm:$0xff]
        %v1054 = vld [vmem:[#allocation4 + $0xa0] sm:$0xff]
        %v1055 = vld [vmem:[#allocation4 + $0xa8] sm:$0xff]
        %v1056 = vld [vmem:[#allocation4 + $0xb0] sm:$0x7]
        %v1057 = vld [vmem:[#allocation4 + $0xb8] sm:$0x7]
        %1059 = vset.pattern.permute.xlu0 0
        %1060 = vperm.xlu0 %1059, %v1052
        %v1061 = vpop.permute.xlu0 %1060
        %1064 = vset.pattern.permute.xlu0 0
        %1065 = vperm.xlu0 %1064, %v1053
        %v1066 = vpop.permute.xlu0 %1065
        %1069 = vset.pattern.permute.xlu0 0
        %1070 = vperm.xlu0 %1069, %v1054
        %v1071 = vpop.permute.xlu0 %1070
        %1074 = vset.pattern.permute.xlu0 0
        %1075 = vperm.xlu0 %1074, %v1055
        %v1076 = vpop.permute.xlu0 %1075
        %v1079 = vsel %vm370, %v1048, 0
        %v1082 = vsel %vm370, %v1049, 0
        %v1085 = vsel %vm370, %v1050, 0
        %v1088 = vsel %vm370, %v1051, 0
        %1090 = vmatprep.subr.mxu0 0.0
        %1091 = vmatpush1.msra.mxu0 %v1045
        %1092 = vmatprep.subr.mxu0 0.0
        %1093 = vmatpush1.msra.mxu0 0.0
        %1094 = vmatprep.subr.mxu0 0.0
        %1095 = vmatpush1.msra.mxu0 0.0
        %1096 = vmatprep.subr.mxu0 0.0
        %1097 = vmatpush1.msra.mxu0 0.0
        %1098 = vmatprep.subr.mxu0 0.0
        %1099 = vmatpush1.msra.mxu0 0.0
        %1100 = vmatprep.subr.mxu0 0.0
        %1101 = vmatpush1.msra.mxu0 0.0
        %1102 = vmatprep.subr.mxu0 0.0
        %1103 = vmatpush1.msra.mxu0 0.0
        %1104 = vmatprep.subr.mxu0 0.0
        %1105 = vmatpush1.msra.mxu0 0.0
        %1106 = vmatprep.subr.mxu0 0.0
        %1107 = vmatpush1.msra.mxu0 0.0
        %1108 = vmatprep.subr.mxu0 0.0
        %1109 = vmatpush1.msra.mxu0 0.0
        %1110 = vmatprep.subr.mxu0 0.0
        %1111 = vmatpush1.msra.mxu0 0.0
        %1112 = vmatprep.subr.mxu0 0.0
        %1113 = vmatpush1.msra.mxu0 0.0
        %1114 = vmatprep.subr.mxu0 0.0
        %1115 = vmatpush1.msra.mxu0 0.0
        %1116 = vmatprep.subr.mxu0 0.0
        %1117 = vmatpush1.msra.mxu0 0.0
        %1118 = vmatprep.subr.mxu0 0.0
        %1119 = vmatpush1.msra.mxu0 0.0
        %1120 = vmatprep.subr.mxu0 0.0
        %1121 = vmatpush1.msra.mxu0 0.0
        %1122 = vmatprep.subr.mxu0 0.0
        %1123 = vmatpush1.msra.mxu0 0.0
        %1124 = vmatprep.subr.mxu0 0.0
        %1125 = vmatpush1.msra.mxu0 0.0
        %1126 = vmatprep.subr.mxu0 0.0
        %1127 = vmatpush1.msra.mxu0 0.0
        %1128 = vmatprep.subr.mxu0 0.0
        %1129 = vmatpush1.msra.mxu0 0.0
        %1130 = vmatprep.subr.mxu0 0.0
        %1131 = vmatpush1.msra.mxu0 0.0
        %1132 = vmatprep.subr.mxu0 0.0
        %1133 = vmatpush1.msra.mxu0 0.0
        %1134 = vmatprep.subr.mxu0 0.0
        %1135 = vmatpush1.msra.mxu0 0.0
        %1136 = vmatprep.subr.mxu0 0.0
        %1137 = vmatpush1.msra.mxu0 0.0
        %1138 = vmatprep.subr.mxu0 0.0
        %1139 = vmatpush1.msra.mxu0 0.0
        %1140 = vmatprep.subr.mxu0 0.0
        %1141 = vmatpush1.msra.mxu0 0.0
        %1142 = vmatprep.subr.mxu0 0.0
        %1143 = vmatpush1.msra.mxu0 0.0
        %1144 = vmatprep.subr.mxu0 0.0
        %1145 = vmatpush1.msra.mxu0 0.0
        %1146 = vmatprep.subr.mxu0 0.0
        %1147 = vmatpush1.msra.mxu0 0.0
        %1148 = vmatprep.subr.mxu0 0.0
        %1149 = vmatpush1.msra.mxu0 0.0
        %1150 = vmatprep.subr.mxu0 0.0
        %1151 = vmatpush1.msra.mxu0 0.0
        %1152 = vmatprep.subr.mxu0 0.0
        %1153 = vmatpush1.msra.mxu0 0.0
        %1154 = vmatprep.mubr.f32.mxu0 0.0
        %1155 = vmatmul.mubr.f32.gmra.mrb[0].mxu0 %v1079
        %v1156 = vpop.f32.mrb[0].mxu0
        %v1157 = vadd.f32 %v1061, %v1156
        %v1158 = vpop.f32.mrb[0].mxu0
        %1159 = vmatprep.mubr.f32.mxu0 0.0
        %1160 = vmatmul.mubr.f32.gmra.mrb[0].mxu0 %v1082
        %v1161 = vpop.f32.mrb[0].mxu0
        %v1162 = vadd.f32 %v1066, %v1161
        %v1163 = vpop.f32.mrb[0].mxu0
        %1164 = vmatprep.mubr.f32.mxu0 0.0
        %1165 = vmatmul.mubr.f32.gmra.mrb[0].mxu0 %v1085
        %v1166 = vpop.f32.mrb[0].mxu0
        %v1167 = vadd.f32 %v1071, %v1166
        %v1168 = vpop.f32.mrb[0].mxu0
        %1169 = vmatprep.mubr.f32.mxu0 0.0
        %1170 = vmatmul.mubr.f32.gmra.mrb[0].mxu0 %v1088
        %v1171 = vpop.f32.mrb[0].mxu0
        %v1172 = vadd.f32 %v1076, %v1171
        %v1173 = vpop.f32.mrb[0].mxu0
        %1174 = vdwg.mxu0
        %v1175 = vmul.f32 %v1157, 0.5
        %v1176 = vmul.f32 %v1162, 0.5
        %v1177 = vmul.f32 %v1167, 0.5
        %v1178 = vmul.f32 %v1172, 0.5
        %v1179 = vmul.f32 %v1157, 0.70710677
        %v1180 = vmul.f32 %v1162, 0.70710677
        %v1181 = vmul.f32 %v1167, 0.70710677
        %v1182 = vmul.f32 %v1172, 0.70710677
        %v1183 = vand.u32 2147483647, %v1179
        %v1184 = vand.u32 2147483647, %v1180
        %v1185 = vand.u32 2147483647, %v1181
        %v1186 = vand.u32 2147483647, %v1182
        %v1187 = vmul.f32 %v1183, 0.3275911
        %v1188 = vmul.f32 %v1184, 0.3275911
        %v1189 = vmul.f32 %v1185, 0.3275911
        %v1190 = vmul.f32 %v1186, 0.3275911
        %v1191 = vadd.f32 %v1187, 1.0
        %v1192 = vadd.f32 %v1188, 1.0
        %v1193 = vadd.f32 %v1189, 1.0
        %v1194 = vadd.f32 %v1190, 1.0
        %v1195 = vrcp.pop %v1191
        %v1196 = vmul.f32 1.0, %v1195
        %v1197 = vrcp.pop %v1192
        %v1198 = vmul.f32 1.0, %v1197
        %v1199 = vrcp.pop %v1193
        %v1200 = vmul.f32 1.0, %v1199
        %v1201 = vrcp.pop %v1194
        %v1202 = vmul.f32 1.0, %v1201
        %v1203 = vmul.f32 %v1196, 1.0614054
        %v1204 = vmul.f32 %v1198, 1.0614054
        %v1205 = vmul.f32 %v1200, 1.0614054
        %v1206 = vmul.f32 %v1202, 1.0614054
        %v1207 = vadd.f32 %v1203, -1.4531521
        %v1208 = vadd.f32 %v1204, -1.4531521
        %v1209 = vadd.f32 %v1205, -1.4531521
        %v1210 = vadd.f32 %v1206, -1.4531521
        %v1211 = vmul.f32 %v1207, %v1196
        %v1212 = vmul.f32 %v1208, %v1198
        %v1213 = vmul.f32 %v1209, %v1200
        %v1214 = vmul.f32 %v1210, %v1202
        %v1215 = vadd.f32 %v1211, 1.4214138
        %v1216 = vadd.f32 %v1212, 1.4214138
        %v1217 = vadd.f32 %v1213, 1.4214138
        %v1218 = vadd.f32 %v1214, 1.4214138
        %v1219 = vmul.f32 %v1215, %v1196
        %v1220 = vmul.f32 %v1216, %v1198
        %v1221 = vmul.f32 %v1217, %v1200
        %v1222 = vmul.f32 %v1218, %v1202
        %v1223 = vadd.f32 %v1219, -0.28449672
        %v1224 = vadd.f32 %v1220, -0.28449672
        %v1225 = vadd.f32 %v1221, -0.28449672
        %v1226 = vadd.f32 %v1222, -0.28449672
        %v1227 = vmul.f32 %v1223, %v1196
        %v1228 = vmul.f32 %v1224, %v1198
        %v1229 = vmul.f32 %v1225, %v1200
        %v1230 = vmul.f32 %v1226, %v1202
        %v1231 = vadd.f32 %v1227, 0.2548296
        %v1232 = vadd.f32 %v1228, 0.2548296
        %v1233 = vadd.f32 %v1229, 0.2548296
        %v1234 = vadd.f32 %v1230, 0.2548296
        %v1235 = vmul.f32 %v1231, %v1196
        %v1236 = vmul.f32 %v1232, %v1198
        %v1237 = vmul.f32 %v1233, %v1200
        %v1238 = vmul.f32 %v1234, %v1202
        %v1239 = vsub.f32 0.0, %v1183
        %v1240 = vsub.f32 0.0, %v1184
        %v1241 = vsub.f32 0.0, %v1185
        %v1242 = vsub.f32 0.0, %v1186
        %v1243 = vmul.f32 %v1239, %v1183
        %v1244 = vmul.f32 %v1240, %v1184
        %v1245 = vmul.f32 %v1241, %v1185
        %v1246 = vmul.f32 %v1242, %v1186
        %v1247 = vmul.f32 %v1243, 1.442695
        %v1248 = vpow.pop %v1247
        %v1249 = vmul.f32 %v1244, 1.442695
        %v1250 = vpow.pop %v1249
        %v1251 = vmul.f32 %v1245, 1.442695
        %v1252 = vpow.pop %v1251
        %v1253 = vmul.f32 %v1246, 1.442695
        %v1254 = vpow.pop %v1253
        %v1255 = vmul.f32 %v1235, %v1248
        %v1256 = vmul.f32 %v1236, %v1250
        %v1257 = vmul.f32 %v1237, %v1252
        %v1258 = vmul.f32 %v1238, %v1254
        %v1259 = vsub.f32 1.0, %v1255
        %v1260 = vsub.f32 1.0, %v1256
        %v1261 = vsub.f32 1.0, %v1257
        %v1262 = vsub.f32 1.0, %v1258
        %vm1263 = vcmp.ge.f32.partialorder %v1179, 0.0
        %vm1264 = vcmp.ge.f32.partialorder %v1180, 0.0
        %vm1265 = vcmp.ge.f32.partialorder %v1181, 0.0
        %vm1266 = vcmp.ge.f32.partialorder %v1182, 0.0
        %v1267 = vsub.f32 0.0, %v1259
        %v1268 = vsub.f32 0.0, %v1260
        %v1269 = vsub.f32 0.0, %v1261
        %v1270 = vsub.f32 0.0, %v1262
        %v1271 = vsel %vm1263, %v1259, %v1267
        %v1272 = vsel %vm1264, %v1260, %v1268
        %v1273 = vsel %vm1265, %v1261, %v1269
        %v1274 = vsel %vm1266, %v1262, %v1270
        %v1275 = vadd.f32 %v1271, 1.0
        %v1276 = vadd.f32 %v1272, 1.0
        %v1277 = vadd.f32 %v1273, 1.0
        %v1278 = vadd.f32 %v1274, 1.0
        %v1279 = vmul.f32 %v1175, %v1275
        %v1280 = vmul.f32 %v1176, %v1276
        %v1281 = vmul.f32 %v1177, %v1277
        %v1282 = vmul.f32 %v1178, %v1278
        %1284 = vset.pattern.permute.xlu0 0
        %1285 = vperm.xlu0 %1284, %v1057
        %v1286 = vpop.permute.xlu0 %1285
        %vm1288 = vcmask 261120
        %v1290 = vsel %vm1288, %v1056, 0
        %1292 = vmatprep.subr.mxu0 0.0
        %1293 = vmatpush1.msra.mxu0 %v1279
        %1294 = vmatprep.subr.mxu0 0.0
        %1295 = vmatpush1.msra.mxu0 %v1280
        %1296 = vmatprep.subr.mxu0 0.0
        %1297 = vmatpush1.msra.mxu0 %v1281
        %1298 = vmatprep.subr.mxu0 0.0
        %1299 = vmatpush1.msra.mxu0 %v1282
        %1300 = vmatprep.subr.mxu0 0.0
        %1301 = vmatpush1.msra.mxu0 0.0
        %1302 = vmatprep.subr.mxu0 0.0
        %1303 = vmatpush1.msra.mxu0 0.0
        %1304 = vmatprep.subr.mxu0 0.0
        %1305 = vmatpush1.msra.mxu0 0.0
        %1306 = vmatprep.subr.mxu0 0.0
        %1307 = vmatpush1.msra.mxu0 0.0
        %1308 = vmatprep.subr.mxu0 0.0
        %1309 = vmatpush1.msra.mxu0 0.0
        %1310 = vmatprep.subr.mxu0 0.0
        %1311 = vmatpush1.msra.mxu0 0.0
        %1312 = vmatprep.subr.mxu0 0.0
        %1313 = vmatpush1.msra.mxu0 0.0
        %1314 = vmatprep.subr.mxu0 0.0
        %1315 = vmatpush1.msra.mxu0 0.0
        %1316 = vmatprep.subr.mxu0 0.0
        %1317 = vmatpush1.msra.mxu0 0.0
        %1318 = vmatprep.subr.mxu0 0.0
        %1319 = vmatpush1.msra.mxu0 0.0
        %1320 = vmatprep.subr.mxu0 0.0
        %1321 = vmatpush1.msra.mxu0 0.0
        %1322 = vmatprep.subr.mxu0 0.0
        %1323 = vmatpush1.msra.mxu0 0.0
        %1324 = vmatprep.subr.mxu0 0.0
        %1325 = vmatpush1.msra.mxu0 0.0
        %1326 = vmatprep.subr.mxu0 0.0
        %1327 = vmatpush1.msra.mxu0 0.0
        %1328 = vmatprep.subr.mxu0 0.0
        %1329 = vmatpush1.msra.mxu0 0.0
        %1330 = vmatprep.subr.mxu0 0.0
        %1331 = vmatpush1.msra.mxu0 0.0
        %1332 = vmatprep.subr.mxu0 0.0
        %1333 = vmatpush1.msra.mxu0 0.0
        %1334 = vmatprep.subr.mxu0 0.0
        %1335 = vmatpush1.msra.mxu0 0.0
        %1336 = vmatprep.subr.mxu0 0.0
        %1337 = vmatpush1.msra.mxu0 0.0
        %1338 = vmatprep.subr.mxu0 0.0
        %1339 = vmatpush1.msra.mxu0 0.0
        %1340 = vmatprep.subr.mxu0 0.0
        %1341 = vmatpush1.msra.mxu0 0.0
        %1342 = vmatprep.subr.mxu0 0.0
        %1343 = vmatpush1.msra.mxu0 0.0
        %1344 = vmatprep.subr.mxu0 0.0
        %1345 = vmatpush1.msra.mxu0 0.0
        %1346 = vmatprep.subr.mxu0 0.0
        %1347 = vmatpush1.msra.mxu0 0.0
        %1348 = vmatprep.subr.mxu0 0.0
        %1349 = vmatpush1.msra.mxu0 0.0
        %1350 = vmatprep.subr.mxu0 0.0
        %1351 = vmatpush1.msra.mxu0 0.0
        %1352 = vmatprep.subr.mxu0 0.0
        %1353 = vmatpush1.msra.mxu0 0.0
        %1354 = vmatprep.subr.mxu0 0.0
        %1355 = vmatpush1.msra.mxu0 0.0
        %1356 = vmatprep.mubr.f32.mxu0 0.0
        %1357 = vmatmul.mubr.f32.gmra.mrb[0].mxu0 %v1290
        %v1358 = vpop.f32.mrb[0].mxu0
        %v1359 = vadd.f32 %v1286, %v1358
        %v1360 = vpop.f32.mrb[0].mxu0
        %1361 = vdwg.mxu0
        %1362 = vxpose.xlu0.b32.start [1/16] %v1359, 128
        %1363 = vxpose.xlu0.b32.cont [2/16] 0.0, 128
        %1364 = vxpose.xlu0.b32.cont [3/16] 0.0, 128
        %1365 = vxpose.xlu0.b32.cont [4/16] 0.0, 128
        %1366 = vxpose.xlu0.b32.cont [5/16] 0.0, 128
        %1367 = vxpose.xlu0.b32.cont [6/16] 0.0, 128
        %1368 = vxpose.xlu0.b32.cont [7/16] 0.0, 128
        %1369 = vxpose.xlu0.b32.cont [8/16] 0.0, 128
        %1370 = vxpose.xlu0.b32.cont [9/16] 0.0, 128
        %1371 = vxpose.xlu0.b32.cont [10/16] 0.0, 128
        %1372 = vxpose.xlu0.b32.cont [11/16] 0.0, 128
        %1373 = vxpose.xlu0.b32.cont [12/16] 0.0, 128
        %1374 = vxpose.xlu0.b32.cont [13/16] 0.0, 128
        %1375 = vxpose.xlu0.b32.cont [14/16] 0.0, 128
        %1376 = vxpose.xlu0.b32.cont [15/16] 0.0, 128
        %1377 = vxpose.xlu0.b32.end [16/16] 0.0, 128
        %v1378 = vpop.trf.xlu0
        %v1379 = vpop.trf.xlu0
        %v1380 = vpop.trf.xlu0
        %v1381 = vpop.trf.xlu0
        %v1382 = vpop.trf.xlu0
        %v1383 = vpop.trf.xlu0
        %v1384 = vpop.trf.xlu0
        %v1385 = vpop.trf.xlu0
        %v1386 = vpop.trf.xlu0
        %v1387 = vpop.trf.xlu0
        %v1388 = vpop.trf.xlu0
        %v1389 = vpop.trf.xlu0
        %v1390 = vpop.trf.xlu0
        %v1391 = vpop.trf.xlu0
        %v1392 = vpop.trf.xlu0
        %v1393 = vpop.trf.xlu0
        %vm1394 = vcmask 23552
        %1395 = vst.msk [vmem:[%s175] sm:$0xff] %vm1394, %v1378
        %1396 = vst.msk [vmem:[%s175 + $0x8] sm:$0xff] %vm1394, %v1379
        %s1397 = smul.u32 2, %s17
        %p1398 = scmp.lt.s32.totalorder %s1397, 3
        %s1399 = scalar_select %p1398, %s1397, 3
        %s1400 = smul.addr %s1399, 8
        %s1401 = scalar_lea.vmem %s2, %s1400
        // Predicated region
        $region37: #{tpu_custom_call.1} parent=27 // pred_check
          %p1402 = pneg %p82
        $region38: #{tpu_custom_call.1} parent=27 // pred_check_branch
          %1404 = sbr.rel (%p1402) target = $region40
        $region39: #{tpu_custom_call.1} parent=27 // pred_region
          %s1405 = smul.u32 2, %s17
        $region40: #{tpu_custom_call.1} parent=27 // pred_fallthru
          _
      $region28: #{tpu_custom_call.1} parent=5 // pred_fallthru
        _
      %p1406 = scmp.le.s32.totalorder 2, %s12
      // Predicated region
      $region41: #{tpu_custom_call.1} parent=5 // pred_check
        %p1407 = pneg %p1406
      $region42: #{tpu_custom_call.1} parent=5 // pred_check_branch
        %1409 = sbr.rel (%p1407) target = $region44
      $region43: #{tpu_custom_call.1} parent=5 // pred_region
        %s1410 = ssub.s32 %s12, 2
        // Predicated region
        $region45: #{tpu_custom_call.1} parent=43 // pred_check
          %p1411 = pneg %p88
        $region46: #{tpu_custom_call.1} parent=43 // pred_check_branch
          %1413 = sbr.rel (%p1411) target = $region48
        $region47: #{tpu_custom_call.1} parent=43 // pred_region
          %s1414 = smul.u32 2, %s18
          %p1415 = scmp.lt.s32.totalorder %s1414, 3
          %s1416 = scalar_select %p1415, %s1414, 3
          %s1417 = smul.addr %s1416, 8
          %s1418 = scalar_lea.vmem %s2, %s1417
        $region48: #{tpu_custom_call.1} parent=43 // pred_fallthru
          _
      $region44: #{tpu_custom_call.1} parent=5 // pred_fallthru
        _
    $region6: #{tpu_custom_call.1} parent=1 // loop_footer
      %s16 = sadd.s32 1, %s12
    $region7: #{tpu_custom_call.1} parent=1 // loop_footer_branch
      %11 = sbr.rel target = $region3
    $region8: #{tpu_custom_call.1} parent=1 // loop_exit
      _
    %1419 = vsyncpa [#allocation3], 1
    %s1420 = scalar_lea.sflag [#allocation3], 1
    %1421 = vsyncpa %s1420, 1
    %1422 = vsyncpa [#allocation5], 1

</llo_original>
